<compile_context>
chip_gen: v5e
topology: v5e:2x2
jax: 0.10.0
libtpu: 0.0.40
codegen_flags: <defaults>
</compile_context>

<pallas_src>
import jax
import jax.numpy as jnp
from jax import lax
from jax.experimental import pallas as pl
from jax.experimental.pallas import tpu as pltpu


@jax.jit
def _gcn_forward_batched(adj, w1, b1, w2, b2, wfc, bfc):
    """adj: (B, N, N) batch of {0,1} adjacency matrices -> (B, N, N) float32."""
    B, N, _ = adj.shape
    H1 = w1.shape[1]          # 16
    H2 = w2.shape[1]          # 8

    # ---- batching geometry: G graphs per grid step, K grid steps -------------
    G = max(1, min(B, 128 // N))
    if B > 1 and (B + G - 1) // G < 2:
        G = (B + 1) // 2                 # keep >= 2 parallel steps (v7x: 2 TCs)
    while (G * N) % 8:                   # sublane alignment of the (GN, N) block
        G += 1
    GN = G * N
    K = (B + G - 1) // G
    Bp = K * G

    adj = adj.astype(jnp.float32)
    if Bp > B:                           # pad with empty graphs (outputs stay 0)
        adj = jnp.concatenate([adj, jnp.zeros((Bp - B, N, N), jnp.float32)], 0)
    adj_c = adj.reshape(Bp * N, N)       # compact per-graph stacking (pure reshape)

    # ---- all parameters packed into one small resident slab (one DMA) --------
    # fc1 split: wa acts on h2[src], wb on h2[dst]; fused into one (H2, 2) dot.
    wab = jnp.concatenate([wfc[:H2, :], wfc[H2:, :]], axis=1).astype(jnp.float32)
    CW = max(H1, H2, 2)

    def pad_cols(m):
        m = m.astype(jnp.float32)
        return jnp.pad(m, ((0, 0), (0, CW - m.shape[1])))

    R_W2 = N
    R_WAB = R_W2 + H1
    R_B1 = R_WAB + H2
    R_B2 = R_B1 + 1
    R_BFC = R_B2 + 1
    RS = R_BFC + 1
    RS_pad = ((RS + 7) // 8) * 8

    slab = jnp.concatenate([
        pad_cols(w1),                    # rows [0, N)
        pad_cols(w2),                    # rows [R_W2, R_W2 + H1)
        pad_cols(wab),                   # rows [R_WAB, R_WAB + H2)
        pad_cols(b1.reshape(1, H1)),     # row  R_B1
        pad_cols(b2.reshape(1, H2)),     # row  R_B2
        pad_cols(bfc.reshape(1, 1)),     # row  R_BFC
    ], axis=0)
    slab = jnp.pad(slab, ((0, RS_pad - RS), (0, 0)))

    f32 = jnp.float32

    def kernel(w_ref, a_ref, out_ref):
        A = a_ref[...]                                         # (GN, N) f32

        # -- index helpers (2-D iotas only; no vector div/rem, no transposes) --
        r_col = lax.broadcasted_iota(jnp.int32, (GN, 1), 0)    # global row r
        if (N & (N - 1)) == 0:
            m_col = jnp.bitwise_and(r_col, N - 1)              # r % N (pow-2 N)
        else:
            m_col = lax.rem(r_col, N)  # TODO(synk): verify vector rem for non-pow2 N
        c2 = lax.broadcasted_iota(jnp.int32, (GN, N), 1)       # within-block col j
        eyeN = jnp.where(m_col == c2, 1.0, 0.0)                # tile(eye(N)): (GN, N)
        lower = m_col >= c2                                    # within-block i >= j

        lo = r_col - m_col                                     # N * (r // N), (GN, 1)
        cF = lax.broadcasted_iota(jnp.int32, (GN, GN), 1)
        bd = (cF >= lo) & (cF < lo + N)                        # block-diagonal mask
        bd_f = jnp.where(bd, 1.0, 0.0)
        diag = cF == r_col

        # -- block-diagonal A^T with forced self-loops, built in VMEM ----------
        # at_full[r, c] = A[c, r % N]  (exact 0/1 "NT" matmul, no XLU transpose)
        at_full = jnp.einsum('rj,cj->rc', eyeN, A, preferred_element_type=f32)
        at_bd = jnp.where(bd, at_full, 0.0)                    # block-diag A^T
        ahat_t = jnp.where((at_bd != 0.0) | diag, 1.0, 0.0)    # + self loops
        deg = jnp.sum(ahat_t, axis=1, keepdims=True)           # (GN, 1), >= 1
        dinv = lax.rsqrt(deg)

        def propagate(m):              # P @ m for all G graphs in one MXU matmul
            return dinv * jnp.dot(ahat_t, dinv * m, preferred_element_type=f32)

        # -- parameter views (single resident slab) ----------------------------
        w1_ = w_ref[0:N, 0:H1]
        w2_ = w_ref[R_W2:R_W2 + H1, 0:H2]
        wab_ = w_ref[R_WAB:R_WAB + H2, 0:2]
        b1_ = w_ref[R_B1:R_B1 + 1, 0:H1]
        b2_ = w_ref[R_B2:R_B2 + 1, 0:H2]
        bfc_ = w_ref[R_BFC:R_BFC + 1, 0:1]

        # -- two GCN layers (node features = eye(N) per graph) -----------------
        w1n = jnp.dot(eyeN, w1_, preferred_element_type=f32)   # X @ W1, per graph
        h1 = jnp.maximum(propagate(w1n) + b1_, 0.0)            # (GN, H1)
        xw2 = jnp.dot(h1, w2_, preferred_element_type=f32)     # (GN, H2)
        h2 = jnp.maximum(propagate(xw2) + b2_, 0.0)            # (GN, H2)

        # -- undirected-edge orientation head (all compact (GN, N) tiles) ------
        ab = jnp.dot(h2, wab_, preferred_element_type=f32)     # (GN, 2)
        a_col = ab[:, 0:1]
        b_col = ab[:, 1:2]
        # block-broadcast a/b across each graph's rows: exact 0/1 folds (MXU idle)
        a_rows = jnp.dot(bd_f, a_col * eyeN, preferred_element_type=f32)  # a[gN+j]
        b_rows = jnp.dot(bd_f, b_col * eyeN, preferred_element_type=f32)  # b[gN+j]

        t_fwd = jax.nn.sigmoid(a_col + b_rows + bfc_)          # sigma(a_i + b_j + c)
        t_rev = 1.0 - jax.nn.sigmoid(a_rows + b_col + bfc_)    # 1 - sigma(a_j + b_i + c)

        # per-graph A^T in compact form (exact fold) for the undirected mask.
        # TODO(synk): the == 1.0 test assumes a {0,1} adjacency, like the torch code.
        at_c = jnp.dot(at_bd, eyeN, preferred_element_type=f32)
        und = (A == 1.0) & (at_c == 1.0)
        out_ref[...] = jnp.where(und, jnp.where(lower, t_rev, t_fwd), A)

    out_c = pl.pallas_call(
        kernel,
        out_shape=jax.ShapeDtypeStruct((K * GN, N), jnp.float32),
        grid=(K,),
        in_specs=[
            pl.BlockSpec((RS_pad, CW), lambda k: (0, 0)),   # params: resident, 1 DMA
            pl.BlockSpec((GN, N), lambda k: (k, 0)),        # G graphs per step, compact
        ],
        out_specs=pl.BlockSpec((GN, N), lambda k: (k, 0)),
        input_output_aliases={1: 0},                        # out reuses the adj slab
        compiler_params=pltpu.CompilerParams(
            dimension_semantics=("parallel",)),
    )(slab, adj_c)

    return out_c.reshape(Bp, N, N)[:B]


def gcn_forward(adj, w1, b1, w2, b2, wfc, bfc):
    """Accepts a single (N, N) graph or a (B, N, N) batch."""
    single = adj.ndim == 2
    if single:
        adj = adj[None]
    out = _gcn_forward_batched(adj, w1, b1, w2, b2, wfc, bfc)
    return out[0] if single else out


def gcn_reference(adj, w1, b1, w2, b2, wfc, bfc):
    """Pure-JAX single-graph reference (mirrors the torch forward)."""
    N = adj.shape[0]
    h2_dim = w2.shape[1]
    eye = jnp.eye(N, dtype=jnp.float32)
    ahat = jnp.where((adj != 0.0) | (eye > 0), 1.0, 0.0)
    deg = jnp.sum(ahat, axis=0)
    dinv = 1.0 / jnp.sqrt(deg)
    nmat = ahat * dinv[:, None] * dinv[None, :]
    P = nmat.T
    h1 = jax.nn.relu(P @ w1 + b1)
    h2 = jax.nn.relu(P @ (h1 @ w2) + b2)
    a_vec = h2 @ wfc[:h2_dim, :]
    b_vec = h2 @ wfc[h2_dim:, :]
    T = jax.nn.sigmoid(a_vec + b_vec.T + bfc[0, 0])
    rows = jnp.arange(N)[:, None]
    cols = jnp.arange(N)[None, :]
    und = (adj == 1.0) & (adj.T == 1.0)
    umask = und & (rows <= cols)
    out = jnp.where(umask, T, adj)
    out = jnp.where(umask.T, 1.0 - T.T, out)
    return out


if __name__ == "__main__":
    N = 16        # num nodes == input_dim (node features are eye(N))
    B = 16        # batch of graphs -> 2 parallel grid steps of 8 graphs each
    key = jax.random.PRNGKey(0)
    k_adj, k1, k2, k3, k4, k5, k6 = jax.random.split(key, 7)

    def make_adj(k):
        ka, kb = jax.random.split(k)
        directed = jax.random.bernoulli(ka, 0.15, (N, N)).astype(jnp.float32)
        directed = directed * (1.0 - jnp.eye(N, dtype=jnp.float32))
        sym = jnp.triu(jax.random.bernoulli(kb, 0.15, (N, N)), 1)
        sym = (sym | sym.T).astype(jnp.float32)
        return jnp.clip(directed + sym, 0.0, 1.0)

    adj = jax.vmap(make_adj)(jax.random.split(k_adj, B))        # (B, N, N)

    # Synthetic parameters: GCNConv(N, 16), GCNConv(16, 8), Linear(16, 1).
    w1 = (0.2 * jax.random.normal(k1, (N, 16))).astype(jnp.float32)
    b1 = (0.05 * jax.random.normal(k2, (1, 16))).astype(jnp.float32)
    w2 = (0.2 * jax.random.normal(k3, (16, 8))).astype(jnp.float32)
    b2 = (0.05 * jax.random.normal(k4, (1, 8))).astype(jnp.float32)
    wfc = (0.2 * jax.random.normal(k5, (16, 1))).astype(jnp.float32)
    bfc = (0.02 * jax.random.normal(k6, (1, 1))).astype(jnp.float32)

    out = gcn_forward(adj, w1, b1, w2, b2, wfc, bfc)
    out = jax.block_until_ready(out)

    ref = jax.vmap(lambda a: gcn_reference(a, w1, b1, w2, b2, wfc, bfc))(adj)
    assert out.shape == (B, N, N) and out.dtype == jnp.float32
    err = float(jnp.max(jnp.abs(out - ref)))
    assert jnp.allclose(out, ref, atol=1e-4, rtol=1e-4), err

    print("KERNEL_OK")
</pallas_src>

<mosaic_0001>
module attributes {stable_mosaic.version = 11 : i64} {
  func.func @kernel(%arg0: i32, %arg1: memref<48x16xf32, #tpu.memory_space<vmem>>, %arg2: memref<128x16xf32, #tpu.memory_space<vmem>>, %arg3: memref<128x16xf32, #tpu.memory_space<vmem>>) attributes {dimension_semantics = [#tpu.dimension_semantics<parallel>], iteration_bounds = array<i64: 2>, scalar_prefetch = 0 : i64, scratch_operands = 0 : i64, tpu.core_type = #tpu.core_type<tc>, window_params = [{pipeline_mode = #tpu.pipeline_mode<synchronous>, transform_indices = @transform_0, window_bounds = array<i64: 48, 16>}, {transform_indices = @transform_1, window_bounds = array<i64: 128, 16>}, {transform_indices = @transform_2, window_bounds = array<i64: 128, 16>}]} {
    %c0 = arith.constant 0 : index
    %c0_0 = arith.constant 0 : index
    %0 = vector.load %arg2[%c0, %c0_0] : memref<128x16xf32, #tpu.memory_space<vmem>>, vector<128x16xf32>
    %1 = tpu.iota {dimensions = array<i32: 0>} : vector<128x1xi32>
    %c15_i32 = arith.constant 15 : i32
    %2 = vector.broadcast %c15_i32 : i32 to vector<128x1xi32>
    %3 = arith.andi %1, %2 : vector<128x1xi32>
    %4 = tpu.iota {dimensions = array<i32: 1>} : vector<128x16xi32>
    %5 = vector.broadcast %3 : vector<128x1xi32> to vector<128x16xi32>
    %6 = arith.cmpi eq, %5, %4 : vector<128x16xi32>
    %cst = arith.constant 1.000000e+00 : f32
    %cst_1 = arith.constant 0.000000e+00 : f32
    %7 = vector.broadcast %cst : f32 to vector<128x16xf32>
    %8 = vector.broadcast %cst_1 : f32 to vector<128x16xf32>
    %9 = arith.select %6, %7, %8 : vector<128x16xi1>, vector<128x16xf32>
    %10 = vector.broadcast %3 : vector<128x1xi32> to vector<128x16xi32>
    %11 = arith.cmpi sge, %10, %4 : vector<128x16xi32>
    %12 = arith.subi %1, %3 : vector<128x1xi32>
    %13 = tpu.iota {dimensions = array<i32: 1>} : vector<128x128xi32>
    %14 = vector.broadcast %12 : vector<128x1xi32> to vector<128x128xi32>
    %15 = arith.cmpi sge, %13, %14 : vector<128x128xi32>
    %c16_i32 = arith.constant 16 : i32
    %16 = vector.broadcast %c16_i32 : i32 to vector<128x1xi32>
    %17 = arith.addi %12, %16 : vector<128x1xi32>
    %18 = vector.broadcast %17 : vector<128x1xi32> to vector<128x128xi32>
    %19 = arith.cmpi slt, %13, %18 : vector<128x128xi32>
    %20 = arith.andi %15, %19 : vector<128x128xi1>
    %cst_2 = arith.constant 1.000000e+00 : f32
    %cst_3 = arith.constant 0.000000e+00 : f32
    %21 = vector.broadcast %cst_2 : f32 to vector<128x128xf32>
    %22 = vector.broadcast %cst_3 : f32 to vector<128x128xf32>
    %23 = arith.select %20, %21, %22 : vector<128x128xi1>, vector<128x128xf32>
    %24 = vector.broadcast %1 : vector<128x1xi32> to vector<128x128xi32>
    %25 = arith.cmpi eq, %13, %24 : vector<128x128xi32>
    "tpu.trace_start"() <{level = 10 : i32, message = "rj,cj->rc"}> : () -> ()
    %cst_4 = arith.constant dense<0.000000e+00> : vector<128x128xf32>
    %26 = tpu.matmul %9, %0, %cst_4 {dimension_numbers = #tpu.dot_dimension_numbers<[1], [1], [0], [0], [0, 0, 1, 0], [], []>} : vector<128x16xf32>, vector<128x16xf32>, vector<128x128xf32> -> vector<128x128xf32>
    %cst_5 = arith.constant 0.000000e+00 : f32
    "tpu.trace_stop"() : () -> ()
    %27 = vector.broadcast %cst_5 : f32 to vector<128x128xf32>
    %28 = arith.select %20, %26, %27 : vector<128x128xi1>, vector<128x128xf32>
    %cst_6 = arith.constant 0.000000e+00 : f32
    %29 = vector.broadcast %cst_6 : f32 to vector<128x128xf32>
    %30 = arith.cmpf one, %28, %29 : vector<128x128xf32>
    %31 = arith.ori %30, %25 : vector<128x128xi1>
    %cst_7 = arith.constant 1.000000e+00 : f32
    %cst_8 = arith.constant 0.000000e+00 : f32
    %32 = vector.broadcast %cst_7 : f32 to vector<128x128xf32>
    %33 = vector.broadcast %cst_8 : f32 to vector<128x128xf32>
    %34 = arith.select %31, %32, %33 : vector<128x128xi1>, vector<128x128xf32>
    %cst_9 = arith.constant dense<0.000000e+00> : vector<128xf32>
    %35 = vector.multi_reduction <add>, %34, %cst_9 [1] : vector<128x128xf32> to vector<128xf32>
    %36 = vector.shape_cast %35 : vector<128xf32> to vector<128x1xf32>
    %37 = math.rsqrt %36 : vector<128x1xf32>
    %c0_10 = arith.constant 0 : index
    %c0_11 = arith.constant 0 : index
    %38 = vector.load %arg1[%c0_10, %c0_11] : memref<48x16xf32, #tpu.memory_space<vmem>>, vector<16x16xf32>
    %c16 = arith.constant 16 : index
    %c0_12 = arith.constant 0 : index
    %39 = vector.load %arg1[%c16, %c0_12] : memref<48x16xf32, #tpu.memory_space<vmem>>, vector<16x8xf32>
    %c32 = arith.constant 32 : index
    %c0_13 = arith.constant 0 : index
    %40 = vector.load %arg1[%c32, %c0_13] : memref<48x16xf32, #tpu.memory_space<vmem>>, vector<8x2xf32>
    %c40 = arith.constant 40 : index
    %c0_14 = arith.constant 0 : index
    %41 = vector.load %arg1[%c40, %c0_14] : memref<48x16xf32, #tpu.memory_space<vmem>>, vector<1x16xf32>
    %c41 = arith.constant 41 : index
    %c0_15 = arith.constant 0 : index
    %42 = vector.load %arg1[%c41, %c0_15] : memref<48x16xf32, #tpu.memory_space<vmem>>, vector<1x8xf32>
    %c42 = arith.constant 42 : index
    %c0_16 = arith.constant 0 : index
    %43 = vector.load %arg1[%c42, %c0_16] : memref<48x16xf32, #tpu.memory_space<vmem>>, vector<1x1xf32>
    %cst_17 = arith.constant dense<0.000000e+00> : vector<128x16xf32>
    %44 = tpu.matmul %9, %38, %cst_17 {dimension_numbers = #tpu.dot_dimension_numbers<[1], [0], [0], [1], [0, 0, 1, 1], [], []>} : vector<128x16xf32>, vector<16x16xf32>, vector<128x16xf32> -> vector<128x16xf32>
    %45 = vector.broadcast %37 : vector<128x1xf32> to vector<128x16xf32>
    %46 = arith.mulf %45, %44 : vector<128x16xf32>
    %cst_18 = arith.constant dense<0.000000e+00> : vector<128x16xf32>
    %47 = tpu.matmul %34, %46, %cst_18 {dimension_numbers = #tpu.dot_dimension_numbers<[1], [0], [0], [1], [0, 0, 1, 1], [], []>} : vector<128x128xf32>, vector<128x16xf32>, vector<128x16xf32> -> vector<128x16xf32>
    %48 = vector.broadcast %37 : vector<128x1xf32> to vector<128x16xf32>
    %49 = arith.mulf %48, %47 : vector<128x16xf32>
    %50 = vector.broadcast %41 : vector<1x16xf32> to vector<128x16xf32>
    %51 = arith.addf %49, %50 : vector<128x16xf32>
    %cst_19 = arith.constant 0.000000e+00 : f32
    %52 = vector.broadcast %cst_19 : f32 to vector<128x16xf32>
    %53 = arith.maximumf %51, %52 : vector<128x16xf32>
    %cst_20 = arith.constant dense<0.000000e+00> : vector<128x8xf32>
    %54 = tpu.matmul %53, %39, %cst_20 {dimension_numbers = #tpu.dot_dimension_numbers<[1], [0], [0], [1], [0, 0, 1, 1], [], []>} : vector<128x16xf32>, vector<16x8xf32>, vector<128x8xf32> -> vector<128x8xf32>
    %55 = vector.broadcast %37 : vector<128x1xf32> to vector<128x8xf32>
    %56 = arith.mulf %55, %54 : vector<128x8xf32>
    %cst_21 = arith.constant dense<0.000000e+00> : vector<128x8xf32>
    %57 = tpu.matmul %34, %56, %cst_21 {dimension_numbers = #tpu.dot_dimension_numbers<[1], [0], [0], [1], [0, 0, 1, 1], [], []>} : vector<128x128xf32>, vector<128x8xf32>, vector<128x8xf32> -> vector<128x8xf32>
    %58 = vector.broadcast %37 : vector<128x1xf32> to vector<128x8xf32>
    %59 = arith.mulf %58, %57 : vector<128x8xf32>
    %60 = vector.broadcast %42 : vector<1x8xf32> to vector<128x8xf32>
    %61 = arith.addf %59, %60 : vector<128x8xf32>
    %cst_22 = arith.constant 0.000000e+00 : f32
    %62 = vector.broadcast %cst_22 : f32 to vector<128x8xf32>
    %63 = arith.maximumf %61, %62 : vector<128x8xf32>
    %cst_23 = arith.constant dense<0.000000e+00> : vector<128x2xf32>
    %64 = tpu.matmul %63, %40, %cst_23 {dimension_numbers = #tpu.dot_dimension_numbers<[1], [0], [0], [1], [0, 0, 1, 1], [], []>} : vector<128x8xf32>, vector<8x2xf32>, vector<128x2xf32> -> vector<128x2xf32>
    %65 = vector.extract_strided_slice %64 {offsets = [0, 0], sizes = [128, 1], strides = [1, 1]} : vector<128x2xf32> to vector<128x1xf32>
    %66 = vector.extract_strided_slice %64 {offsets = [0, 1], sizes = [128, 1], strides = [1, 1]} : vector<128x2xf32> to vector<128x1xf32>
    %67 = vector.broadcast %65 : vector<128x1xf32> to vector<128x16xf32>
    %68 = arith.mulf %67, %9 : vector<128x16xf32>
    %cst_24 = arith.constant dense<0.000000e+00> : vector<128x16xf32>
    %69 = tpu.matmul %23, %68, %cst_24 {dimension_numbers = #tpu.dot_dimension_numbers<[1], [0], [0], [1], [0, 0, 1, 1], [], []>} : vector<128x128xf32>, vector<128x16xf32>, vector<128x16xf32> -> vector<128x16xf32>
    %70 = vector.broadcast %66 : vector<128x1xf32> to vector<128x16xf32>
    %71 = arith.mulf %70, %9 : vector<128x16xf32>
    %cst_25 = arith.constant dense<0.000000e+00> : vector<128x16xf32>
    %72 = tpu.matmul %23, %71, %cst_25 {dimension_numbers = #tpu.dot_dimension_numbers<[1], [0], [0], [1], [0, 0, 1, 1], [], []>} : vector<128x128xf32>, vector<128x16xf32>, vector<128x16xf32> -> vector<128x16xf32>
    %73 = vector.broadcast %65 : vector<128x1xf32> to vector<128x16xf32>
    %74 = arith.addf %73, %72 : vector<128x16xf32>
    %75 = vector.broadcast %43 : vector<1x1xf32> to vector<128x16xf32>
    %76 = arith.addf %74, %75 : vector<128x16xf32>
    %77 = arith.negf %76 : vector<128x16xf32>
    %78 = math.exp %77 : vector<128x16xf32>
    %cst_26 = arith.constant 1.000000e+00 : f32
    %79 = vector.broadcast %cst_26 : f32 to vector<128x16xf32>
    %80 = arith.addf %79, %78 : vector<128x16xf32>
    %81 = arith.divf %79, %80 : vector<128x16xf32>
    %82 = vector.broadcast %66 : vector<128x1xf32> to vector<128x16xf32>
    %83 = arith.addf %69, %82 : vector<128x16xf32>
    %84 = vector.broadcast %43 : vector<1x1xf32> to vector<128x16xf32>
    %85 = arith.addf %83, %84 : vector<128x16xf32>
    %86 = arith.negf %85 : vector<128x16xf32>
    %87 = math.exp %86 : vector<128x16xf32>
    %cst_27 = arith.constant 1.000000e+00 : f32
    %88 = vector.broadcast %cst_27 : f32 to vector<128x16xf32>
    %89 = arith.addf %88, %87 : vector<128x16xf32>
    %90 = arith.divf %88, %89 : vector<128x16xf32>
    %cst_28 = arith.constant 1.000000e+00 : f32
    %91 = vector.broadcast %cst_28 : f32 to vector<128x16xf32>
    %92 = arith.subf %91, %90 : vector<128x16xf32>
    %cst_29 = arith.constant dense<0.000000e+00> : vector<128x16xf32>
    %93 = tpu.matmul %28, %9, %cst_29 {dimension_numbers = #tpu.dot_dimension_numbers<[1], [0], [0], [1], [0, 0, 1, 1], [], []>} : vector<128x128xf32>, vector<128x16xf32>, vector<128x16xf32> -> vector<128x16xf32>
    %cst_30 = arith.constant 1.000000e+00 : f32
    %94 = vector.broadcast %cst_30 : f32 to vector<128x16xf32>
    %95 = arith.cmpf oeq, %0, %94 : vector<128x16xf32>
    %cst_31 = arith.constant 1.000000e+00 : f32
    %96 = vector.broadcast %cst_31 : f32 to vector<128x16xf32>
    %97 = arith.cmpf oeq, %93, %96 : vector<128x16xf32>
    %98 = arith.andi %95, %97 : vector<128x16xi1>
    %99 = arith.select %11, %92, %81 : vector<128x16xi1>, vector<128x16xf32>
    %100 = arith.select %98, %99, %0 : vector<128x16xi1>, vector<128x16xf32>
    %c0_32 = arith.constant 0 : index
    %c0_33 = arith.constant 0 : index
    %101 = vector.load %arg3[%c0_32, %c0_33] : memref<128x16xf32, #tpu.memory_space<vmem>>, vector<128x16xf32>
    tpu.vector_store %arg3[%c0_32, %c0_33], %100 {strides = array<i32>} : memref<128x16xf32, #tpu.memory_space<vmem>>, vector<128x16xf32>,
    return
  }
  func.func @transform_0(%arg0: i32) -> (i32, i32) {
    %c0_i32 = arith.constant 0 : i32
    %c0_i32_0 = arith.constant 0 : i32
    %c0_i32_1 = arith.constant 0 : i32
    return %c0_i32, %c0_i32_0 : i32, i32
  }
  func.func @transform_1(%arg0: i32) -> (i32, i32) {
    %c0_i32 = arith.constant 0 : i32
    %c0_i32_0 = arith.constant 0 : i32
    return %arg0, %c0_i32 : i32, i32
  }
  func.func @transform_2(%arg0: i32) -> (i32, i32) {
    %c0_i32 = arith.constant 0 : i32
    %c0_i32_0 = arith.constant 0 : i32
    return %arg0, %c0_i32 : i32, i32
  }
}

</mosaic_0001>

<llo_original>
// kernel: _gcn_forward_batched.1
$region0: #{_gcn_forward_batched.1}
  #allocation0 [shape = 'u32[]', space=smem, size = 0x4, offset = 0x4, fixed_abs, tag = 'smem constant byte address 0x4 - core index']
  #allocation1 [shape = 'u32[72,128]{1,0:T(1,128)}', space=vmem, size = 0x9000, scoped, tag = 'internal scratch']
  %s0 = inlined_call_operand.vmem [shape: f32[48,16], index: 0, kind: input, shape index: {}]
  %s1 = inlined_call_operand.vmem [shape: f32[256,16], index: 1, kind: input, shape index: {}, may-alias: {1,2}]
  %s2 = inlined_call_operand.vmem [shape: f32[256,16], index: 2, kind: output, shape index: {}, may-alias: {1,2}]
  %s3 = sld [smem:[#allocation0]]
  $region41: #{_gcn_forward_batched.1} parent=0
    _
  %s5 = ssub.s32 1, %s3
  %s6 = scalar_select 0, %s5, %s3
  loop: start=0, step=1, limit=4
  $region2: #{_gcn_forward_batched.1} parent=0 // loop_pre_header
    _
  $region3: #{_gcn_forward_batched.1} parent=0 // loop_header
    %s8 = sphi 0, %s12
    %p9 = scmp.ge.s32.totalorder %s8, 4
    %s16 = sphi 0, %s16
    %s18 = sphi 0, %s16
    %s19 = sphi 0, %s18
    %s33 = sphi 0, %s19
    %s39 = sphi 0, %s41
    %s42 = sphi 0, %s39
    %s43 = sphi 0, %s42
    %s59 = sphi 0, %s43
    %s65 = sphi 0, %s67
    %s68 = sphi 0, %s65
    %s69 = sphi 0, %s68
    %s85 = sphi 0, %s69
  $region4: #{_gcn_forward_batched.1} parent=0 // loop_header_branch
    %11 = sbr.rel (%p9) target = $region8
  $region5: #{_gcn_forward_batched.1} parent=0 // loop_body
    %s13 = ssub.s32 %s8, 1
    %s14 = ssub.s32 %s8, 2
    %s15 = sadd.s32 %s8, 1
    %s17 = sadd.s32 %s16, 1
    %p20 = scmp.eq.s32.totalorder %s8, 1
    %p21 = scmp.ne.s32.totalorder %s16, %s18
    %p22 = scmp.eq.s32.totalorder %s8, 0
    %p23 = por %p21, %p22
    %p24 = scmp.ne.s32.totalorder %s16, %s18
    %p25 = scmp.eq.s32.totalorder %s13, 1
    %p26 = por %p24, %p25
    %p27 = scmp.ne.s32.totalorder %s18, %s19
    %p28 = scmp.eq.s32.totalorder %s13, 0
    %p29 = por %p27, %p28
    %p30 = scmp.ne.s32.totalorder %s18, %s19
    %p31 = scmp.eq.s32.totalorder %s14, 1
    %p32 = por %p30, %p31
    %p34 = scmp.ne.s32.totalorder %s19, %s33
    %p35 = scmp.eq.s32.totalorder %s14, 0
    %p36 = por %p34, %p35
    %s37 = ssub.s32 %s8, %s15
    %p38 = scmp.eq.s32.totalorder %s37, 0
    %s40 = sadd.s32 %s39, 1
    %s41 = scalar_select %p38, %s39, %s40
    %p44 = pneg %p38
    %p45 = scmp.eq.s32.totalorder %s8, 1
    %p46 = por %p44, %p45
    %p47 = scmp.ne.s32.totalorder %s39, %s42
    %p48 = scmp.eq.s32.totalorder %s8, 0
    %p49 = por %p47, %p48
    %p50 = scmp.ne.s32.totalorder %s39, %s42
    %p51 = scmp.eq.s32.totalorder %s13, 1
    %p52 = por %p50, %p51
    %p53 = scmp.ne.s32.totalorder %s42, %s43
    %p54 = scmp.eq.s32.totalorder %s13, 0
    %p55 = por %p53, %p54
    %p56 = scmp.ne.s32.totalorder %s42, %s43
    %p57 = scmp.eq.s32.totalorder %s14, 1
    %p58 = por %p56, %p57
    %p60 = scmp.ne.s32.totalorder %s43, %s59
    %p61 = scmp.eq.s32.totalorder %s14, 0
    %p62 = por %p60, %p61
    %s63 = ssub.s32 %s8, %s15
    %p64 = scmp.eq.s32.totalorder %s63, 0
    %s66 = sadd.s32 %s65, 1
    %s67 = scalar_select %p64, %s65, %s66
    %p70 = pneg %p64
    %p71 = scmp.eq.s32.totalorder %s8, 1
    %p72 = por %p70, %p71
    %p73 = scmp.ne.s32.totalorder %s65, %s68
    %p74 = scmp.eq.s32.totalorder %s8, 0
    %p75 = por %p73, %p74
    %p76 = scmp.ne.s32.totalorder %s65, %s68
    %p77 = scmp.eq.s32.totalorder %s13, 1
    %p78 = por %p76, %p77
    %p79 = scmp.ne.s32.totalorder %s68, %s69
    %p80 = scmp.eq.s32.totalorder %s13, 0
    %p81 = por %p79, %p80
    %p82 = scmp.ne.s32.totalorder %s68, %s69
    %p83 = scmp.eq.s32.totalorder %s14, 1
    %p84 = por %p82, %p83
    %p86 = scmp.ne.s32.totalorder %s69, %s85
    %p87 = scmp.eq.s32.totalorder %s14, 0
    %p88 = por %p86, %p87
    %p89 = scmp.le.s32.totalorder 1, %s8
    %p90 = scmp.lt.s32.totalorder %s8, 3
    %p91 = pnand %p89, %p90
    %p92 = pneg %p91
    // Predicated region
    $region9: #{_gcn_forward_batched.1} parent=5 // pred_check
      _
    $region10: #{_gcn_forward_batched.1} parent=5 // pred_check_branch
      %94 = sbr.rel (%p91) target = $region12
    $region11: #{_gcn_forward_batched.1} parent=5 // pred_region
      %s95 = ssub.s32 %s8, 1
      // Predicated region
      $region13: #{_gcn_forward_batched.1} parent=11 // pred_check
        %p96 = pneg %p29
      $region14: #{_gcn_forward_batched.1} parent=11 // pred_check_branch
        %98 = sbr.rel (%p96) target = $region16
      $region15: #{_gcn_forward_batched.1} parent=11 // pred_region
        _
      $region16: #{_gcn_forward_batched.1} parent=11 // pred_fallthru
        _
    $region12: #{_gcn_forward_batched.1} parent=5 // pred_fallthru
      _
    %p99 = scmp.lt.s32.totalorder %s8, 2
    // Predicated region
    $region17: #{_gcn_forward_batched.1} parent=5 // pred_check
      %p100 = pneg %p99
    $region18: #{_gcn_forward_batched.1} parent=5 // pred_check_branch
      %102 = sbr.rel (%p100) target = $region20
    $region19: #{_gcn_forward_batched.1} parent=5 // pred_region
      // Predicated region
      $region21: #{_gcn_forward_batched.1} parent=19 // pred_check
        %p103 = pneg %p49
      $region22: #{_gcn_forward_batched.1} parent=19 // pred_check_branch
        %105 = sbr.rel (%p103) target = $region24
      $region23: #{_gcn_forward_batched.1} parent=19 // pred_region
        %s106 = smul.u32 16, %s8
        %p107 = scmp.lt.s32.totalorder %s106, 31
        %s108 = scalar_select %p107, %s106, 31
        %s109 = smul.addr %s108, 8
        %s110 = scalar_lea.vmem %s1, %s109
        %s111 = smul.u32 16, %s8
      $region24: #{_gcn_forward_batched.1} parent=19 // pred_fallthru
        _
    $region20: #{_gcn_forward_batched.1} parent=5 // pred_fallthru
      _
    %p112 = scmp.le.s32.totalorder 1, %s8
    %p113 = scmp.lt.s32.totalorder %s8, 3
    %p114 = pnand %p112, %p113
    %p115 = pneg %p114
    // Predicated region
    $region25: #{_gcn_forward_batched.1} parent=5 // pred_check
      _
    $region26: #{_gcn_forward_batched.1} parent=5 // pred_check_branch
      %117 = sbr.rel (%p114) target = $region28
    $region27: #{_gcn_forward_batched.1} parent=5 // pred_region
      %s118 = ssub.s32 %s8, 1
      %p119 = pneg %p29
      %p120 = pneg %p26
      %s121 = smul.u32 16, %s13
      %p122 = scmp.lt.s32.totalorder %s121, 31
      %s123 = scalar_select %p122, %s121, 31
      %s124 = smul.addr %s123, 8
      %s125 = scalar_lea.vmem %s1, %s124
      %p126 = pneg %p55
      %p127 = pneg %p52
      %p128 = pneg %p81
      %p129 = pneg %p78
      %s130 = smul.u32 16, %s13
      %p131 = scmp.lt.s32.totalorder %s130, 31
      %s132 = scalar_select %p131, %s130, 31
      %s133 = smul.addr %s132, 8
      %s134 = scalar_lea.vmem %s2, %s133
      %s135 = smul.u32 16, %s13
      %p136 = scmp.lt.s32.totalorder %s135, 31
      %s137 = scalar_select %p136, %s135, 31
      %s138 = smul.addr %s137, 8
      %s139 = scalar_lea.vmem %s1, %s138
      %s140 = smul.u32 16, %s13
      %s141 = smul.u32 16, %s13
      %p142 = scmp.lt.s32.totalorder %s141, 31
      %s143 = scalar_select %p142, %s141, 31
      %s144 = smul.addr %s143, 8
      %s145 = scalar_lea.vmem %s2, %s144
      %s146 = smul.u32 16, %s13
      %v147 = vld [vmem:[%s139] sm:$0xff]
      %v148 = vld [vmem:[%s139 + $0x8] sm:$0xff]
      %v149 = vld [vmem:[%s139 + $0x10] sm:$0xff]
      %v150 = vld [vmem:[%s139 + $0x18] sm:$0xff]
      %v151 = vld [vmem:[%s139 + $0x20] sm:$0xff]
      %v152 = vld [vmem:[%s139 + $0x28] sm:$0xff]
      %v153 = vld [vmem:[%s139 + $0x30] sm:$0xff]
      %v154 = vld [vmem:[%s139 + $0x38] sm:$0xff]
      %v155 = vld [vmem:[%s139 + $0x40] sm:$0xff]
      %v156 = vld [vmem:[%s139 + $0x48] sm:$0xff]
      %v157 = vld [vmem:[%s139 + $0x50] sm:$0xff]
      %v158 = vld [vmem:[%s139 + $0x58] sm:$0xff]
      %v159 = vld [vmem:[%s139 + $0x60] sm:$0xff]
      %v160 = vld [vmem:[%s139 + $0x68] sm:$0xff]
      %v161 = vld [vmem:[%s139 + $0x70] sm:$0xff]
      %v162 = vld [vmem:[%s139 + $0x78] sm:$0xff]
      %v163 = vlaneseq
      %v164 = vshrl.u32 %v163, 7
      %v165 = vadd.s32 %v164, 8
      %v166 = vadd.s32 %v164, 16
      %v167 = vadd.s32 %v164, 24
      %v168 = vadd.s32 %v164, 32
      %v169 = vadd.s32 %v164, 40
      %v170 = vadd.s32 %v164, 48
      %v171 = vadd.s32 %v164, 56
      %v172 = vadd.s32 %v164, 64
      %v173 = vadd.s32 %v164, 72
      %v174 = vadd.s32 %v164, 80
      %v175 = vadd.s32 %v164, 88
      %v176 = vadd.s32 %v164, 96
      %v177 = vadd.s32 %v164, 104
      %v178 = vadd.s32 %v164, 112
      %v179 = vadd.s32 %v164, 120
      %v180 = vand.u32 %v164, 15
      %v181 = vand.u32 %v165, 15
      %v182 = vand.u32 %v166, 15
      %v183 = vand.u32 %v167, 15
      %v184 = vand.u32 %v168, 15
      %v185 = vand.u32 %v169, 15
      %v186 = vand.u32 %v170, 15
      %v187 = vand.u32 %v171, 15
      %v188 = vand.u32 %v172, 15
      %v189 = vand.u32 %v173, 15
      %v190 = vand.u32 %v174, 15
      %v191 = vand.u32 %v175, 15
      %v192 = vand.u32 %v176, 15
      %v193 = vand.u32 %v177, 15
      %v194 = vand.u32 %v178, 15
      %v195 = vand.u32 %v179, 15
      %v196 = vlaneseq
      %v197 = vand.u32 %v196, 127
      %vm198 = vcmp.eq.s32.totalorder %v180, %v197
      %vm199 = vcmp.eq.s32.totalorder %v181, %v197
      %vm200 = vcmp.eq.s32.totalorder %v182, %v197
      %vm201 = vcmp.eq.s32.totalorder %v183, %v197
      %vm202 = vcmp.eq.s32.totalorder %v184, %v197
      %vm203 = vcmp.eq.s32.totalorder %v185, %v197
      %vm204 = vcmp.eq.s32.totalorder %v186, %v197
      %vm205 = vcmp.eq.s32.totalorder %v187, %v197
      %vm206 = vcmp.eq.s32.totalorder %v188, %v197
      %vm207 = vcmp.eq.s32.totalorder %v189, %v197
      %vm208 = vcmp.eq.s32.totalorder %v190, %v197
      %vm209 = vcmp.eq.s32.totalorder %v191, %v197
      %vm210 = vcmp.eq.s32.totalorder %v192, %v197
      %vm211 = vcmp.eq.s32.totalorder %v193, %v197
      %vm212 = vcmp.eq.s32.totalorder %v194, %v197
      %vm213 = vcmp.eq.s32.totalorder %v195, %v197
      %v214 = vsel %vm198, 1.0, 0.0
      %v215 = vsel %vm199, 1.0, 0.0
      %v216 = vsel %vm200, 1.0, 0.0
      %v217 = vsel %vm201, 1.0, 0.0
      %v218 = vsel %vm202, 1.0, 0.0
      %v219 = vsel %vm203, 1.0, 0.0
      %v220 = vsel %vm204, 1.0, 0.0
      %v221 = vsel %vm205, 1.0, 0.0
      %v222 = vsel %vm206, 1.0, 0.0
      %v223 = vsel %vm207, 1.0, 0.0
      %v224 = vsel %vm208, 1.0, 0.0
      %v225 = vsel %vm209, 1.0, 0.0
      %v226 = vsel %vm210, 1.0, 0.0
      %v227 = vsel %vm211, 1.0, 0.0
      %v228 = vsel %vm212, 1.0, 0.0
      %v229 = vsel %vm213, 1.0, 0.0
      %vm230 = vcmp.ge.s32.totalorder %v180, %v197
      %vm231 = vcmp.ge.s32.totalorder %v181, %v197
      %vm232 = vcmp.ge.s32.totalorder %v182, %v197
      %vm233 = vcmp.ge.s32.totalorder %v183, %v197
      %vm234 = vcmp.ge.s32.totalorder %v184, %v197
      %vm235 = vcmp.ge.s32.totalorder %v185, %v197
      %vm236 = vcmp.ge.s32.totalorder %v186, %v197
      %vm237 = vcmp.ge.s32.totalorder %v187, %v197
      %vm238 = vcmp.ge.s32.totalorder %v188, %v197
      %vm239 = vcmp.ge.s32.totalorder %v189, %v197
      %vm240 = vcmp.ge.s32.totalorder %v190, %v197
      %vm241 = vcmp.ge.s32.totalorder %v191, %v197
      %vm242 = vcmp.ge.s32.totalorder %v192, %v197
      %vm243 = vcmp.ge.s32.totalorder %v193, %v197
      %vm244 = vcmp.ge.s32.totalorder %v194, %v197
      %vm245 = vcmp.ge.s32.totalorder %v195, %v197
      %v246 = vsub.s32 %v164, %v180
      %v247 = vsub.s32 %v165, %v181
      %v248 = vsub.s32 %v166, %v182
      %v249 = vsub.s32 %v167, %v183
      %v250 = vsub.s32 %v168, %v184
      %v251 = vsub.s32 %v169, %v185
      %v252 = vsub.s32 %v170, %v186
      %v253 = vsub.s32 %v171, %v187
      %v254 = vsub.s32 %v172, %v188
      %v255 = vsub.s32 %v173, %v189
      %v256 = vsub.s32 %v174, %v190
      %v257 = vsub.s32 %v175, %v191
      %v258 = vsub.s32 %v176, %v192
      %v259 = vsub.s32 %v177, %v193
      %v260 = vsub.s32 %v178, %v194
      %v261 = vsub.s32 %v179, %v195
      %vm262 = vcmp.ge.s32.totalorder %v197, %v246
      %vm263 = vcmp.ge.s32.totalorder %v197, %v247
      %vm264 = vcmp.ge.s32.totalorder %v197, %v248
      %vm265 = vcmp.ge.s32.totalorder %v197, %v249
      %vm266 = vcmp.ge.s32.totalorder %v197, %v250
      %vm267 = vcmp.ge.s32.totalorder %v197, %v251
      %vm268 = vcmp.ge.s32.totalorder %v197, %v252
      %vm269 = vcmp.ge.s32.totalorder %v197, %v253
      %vm270 = vcmp.ge.s32.totalorder %v197, %v254
      %vm271 = vcmp.ge.s32.totalorder %v197, %v255
      %vm272 = vcmp.ge.s32.totalorder %v197, %v256
      %vm273 = vcmp.ge.s32.totalorder %v197, %v257
      %vm274 = vcmp.ge.s32.totalorder %v197, %v258
      %vm275 = vcmp.ge.s32.totalorder %v197, %v259
      %vm276 = vcmp.ge.s32.totalorder %v197, %v260
      %vm277 = vcmp.ge.s32.totalorder %v197, %v261
      %v278 = vadd.s32 %v246, 16
      %v279 = vadd.s32 %v247, 16
      %v280 = vadd.s32 %v248, 16
      %v281 = vadd.s32 %v249, 16
      %v282 = vadd.s32 %v250, 16
      %v283 = vadd.s32 %v251, 16
      %v284 = vadd.s32 %v252, 16
      %v285 = vadd.s32 %v253, 16
      %v286 = vadd.s32 %v254, 16
      %v287 = vadd.s32 %v255, 16
      %v288 = vadd.s32 %v256, 16
      %v289 = vadd.s32 %v257, 16
      %v290 = vadd.s32 %v258, 16
      %v291 = vadd.s32 %v259, 16
      %v292 = vadd.s32 %v260, 16
      %v293 = vadd.s32 %v261, 16
      %vm294 = vcmp.lt.s32.totalorder %v197, %v278
      %vm295 = vcmp.lt.s32.totalorder %v197, %v279
      %vm296 = vcmp.lt.s32.totalorder %v197, %v280
      %vm297 = vcmp.lt.s32.totalorder %v197, %v281
      %vm298 = vcmp.lt.s32.totalorder %v197, %v282
      %vm299 = vcmp.lt.s32.totalorder %v197, %v283
      %vm300 = vcmp.lt.s32.totalorder %v197, %v284
      %vm301 = vcmp.lt.s32.totalorder %v197, %v285
      %vm302 = vcmp.lt.s32.totalorder %v197, %v286
      %vm303 = vcmp.lt.s32.totalorder %v197, %v287
      %vm304 = vcmp.lt.s32.totalorder %v197, %v288
      %vm305 = vcmp.lt.s32.totalorder %v197, %v289
      %vm306 = vcmp.lt.s32.totalorder %v197, %v290
      %vm307 = vcmp.lt.s32.totalorder %v197, %v291
      %vm308 = vcmp.lt.s32.totalorder %v197, %v292
      %vm309 = vcmp.lt.s32.totalorder %v197, %v293
      %vm310 = vmand %vm262, %vm294
      %vm311 = vmand %vm263, %vm295
      %vm312 = vmand %vm264, %vm296
      %vm313 = vmand %vm265, %vm297
      %vm314 = vmand %vm266, %vm298
      %vm315 = vmand %vm267, %vm299
      %vm316 = vmand %vm268, %vm300
      %vm317 = vmand %vm269, %vm301
      %vm318 = vmand %vm270, %vm302
      %vm319 = vmand %vm271, %vm303
      %vm320 = vmand %vm272, %vm304
      %vm321 = vmand %vm273, %vm305
      %vm322 = vmand %vm274, %vm306
      %vm323 = vmand %vm275, %vm307
      %vm324 = vmand %vm276, %vm308
      %vm325 = vmand %vm277, %vm309
      %v326 = vsel %vm310, 1.0, 0.0
      %v327 = vsel %vm311, 1.0, 0.0
      %v328 = vsel %vm312, 1.0, 0.0
      %v329 = vsel %vm313, 1.0, 0.0
      %v330 = vsel %vm314, 1.0, 0.0
      %v331 = vsel %vm315, 1.0, 0.0
      %v332 = vsel %vm316, 1.0, 0.0
      %v333 = vsel %vm317, 1.0, 0.0
      %v334 = vsel %vm318, 1.0, 0.0
      %v335 = vsel %vm319, 1.0, 0.0
      %v336 = vsel %vm320, 1.0, 0.0
      %v337 = vsel %vm321, 1.0, 0.0
      %v338 = vsel %vm322, 1.0, 0.0
      %v339 = vsel %vm323, 1.0, 0.0
      %v340 = vsel %vm324, 1.0, 0.0
      %v341 = vsel %vm325, 1.0, 0.0
      %vm342 = vcmp.eq.s32.totalorder %v197, %v164
      %vm343 = vcmp.eq.s32.totalorder %v197, %v165
      %vm344 = vcmp.eq.s32.totalorder %v197, %v166
      %vm345 = vcmp.eq.s32.totalorder %v197, %v167
      %vm346 = vcmp.eq.s32.totalorder %v197, %v168
      %vm347 = vcmp.eq.s32.totalorder %v197, %v169
      %vm348 = vcmp.eq.s32.totalorder %v197, %v170
      %vm349 = vcmp.eq.s32.totalorder %v197, %v171
      %vm350 = vcmp.eq.s32.totalorder %v197, %v172
      %vm351 = vcmp.eq.s32.totalorder %v197, %v173
      %vm352 = vcmp.eq.s32.totalorder %v197, %v174
      %vm353 = vcmp.eq.s32.totalorder %v197, %v175
      %vm354 = vcmp.eq.s32.totalorder %v197, %v176
      %vm355 = vcmp.eq.s32.totalorder %v197, %v177
      %vm356 = vcmp.eq.s32.totalorder %v197, %v178
      %vm357 = vcmp.eq.s32.totalorder %v197, %v179
      %vm358 = vcmask 130048
      %v360 = vsel %vm358, %v214, 0
      %v363 = vsel %vm358, %v215, 0
      %v366 = vsel %vm358, %v216, 0
      %v369 = vsel %vm358, %v217, 0
      %v372 = vsel %vm358, %v218, 0
      %v375 = vsel %vm358, %v219, 0
      %v378 = vsel %vm358, %v220, 0
      %v381 = vsel %vm358, %v221, 0
      %v384 = vsel %vm358, %v222, 0
      %v387 = vsel %vm358, %v223, 0
      %v390 = vsel %vm358, %v224, 0
      %v393 = vsel %vm358, %v225, 0
      %v396 = vsel %vm358, %v226, 0
      %v399 = vsel %vm358, %v227, 0
      %v402 = vsel %vm358, %v228, 0
      %v405 = vsel %vm358, %v229, 0
      %v408 = vsel %vm358, %v147, 0
      %v411 = vsel %vm358, %v148, 0
      %v414 = vsel %vm358, %v149, 0
      %v417 = vsel %vm358, %v150, 0
      %v420 = vsel %vm358, %v151, 0
      %v423 = vsel %vm358, %v152, 0
      %v426 = vsel %vm358, %v153, 0
      %v429 = vsel %vm358, %v154, 0
      %v432 = vsel %vm358, %v155, 0
      %v435 = vsel %vm358, %v156, 0
      %v438 = vsel %vm358, %v157, 0
      %v441 = vsel %vm358, %v158, 0
      %v444 = vsel %vm358, %v159, 0
      %v447 = vsel %vm358, %v160, 0
      %v450 = vsel %vm358, %v161, 0
      %v453 = vsel %vm358, %v162, 0
      %455 = vmatpush.xpose.msra.mxu0 %v453
      %456 = vmatpush.xpose.msra.mxu0 %v450
      %457 = vmatpush.xpose.msra.mxu0 %v447
      %458 = vmatpush.xpose.msra.mxu0 %v444
      %459 = vmatpush.xpose.msra.mxu0 %v441
      %460 = vmatpush.xpose.msra.mxu0 %v438
      %461 = vmatpush.xpose.msra.mxu0 %v435
      %462 = vmatpush.xpose.msra.mxu0 %v432
      %463 = vmatpush.xpose.msra.mxu0 %v429
      %464 = vmatpush.xpose.msra.mxu0 %v426
      %465 = vmatpush.xpose.msra.mxu0 %v423
      %466 = vmatpush.xpose.msra.mxu0 %v420
      %467 = vmatpush.xpose.msra.mxu0 %v417
      %468 = vmatpush.xpose.msra.mxu0 %v414
      %469 = vmatpush.xpose.msra.mxu0 %v411
      %470 = vmatpush.xpose.msra.mxu0 %v408
      %471 = vmatmul.f32.gmra.mxu0 %v360
      %v472 = vpop.f32.mrf.mxu0
      %v473 = vadd.f32 0.0, %v472
      %474 = vmatmul.f32.gmra.mxu0 %v363
      %v475 = vpop.f32.mrf.mxu0
      %v476 = vadd.f32 0.0, %v475
      %477 = vmatmul.f32.gmra.mxu0 %v366
      %v478 = vpop.f32.mrf.mxu0
      %v479 = vadd.f32 0.0, %v478
      %480 = vmatmul.f32.gmra.mxu0 %v369
      %v481 = vpop.f32.mrf.mxu0
      %v482 = vadd.f32 0.0, %v481
      %483 = vmatmul.f32.gmra.mxu0 %v372
      %v484 = vpop.f32.mrf.mxu0
      %v485 = vadd.f32 0.0, %v484
      %486 = vmatmul.f32.gmra.mxu0 %v375
      %v487 = vpop.f32.mrf.mxu0
      %v488 = vadd.f32 0.0, %v487
      %489 = vmatmul.f32.gmra.mxu0 %v378
      %v490 = vpop.f32.mrf.mxu0
      %v491 = vadd.f32 0.0, %v490
      %492 = vmatmul.f32.gmra.mxu0 %v381
      %v493 = vpop.f32.mrf.mxu0
      %v494 = vadd.f32 0.0, %v493
      %495 = vmatmul.f32.gmra.mxu0 %v384
      %v496 = vpop.f32.mrf.mxu0
      %v497 = vadd.f32 0.0, %v496
      %498 = vmatmul.f32.gmra.mxu0 %v387
      %v499 = vpop.f32.mrf.mxu0
      %v500 = vadd.f32 0.0, %v499
      %501 = vmatmul.f32.gmra.mxu0 %v390
      %v502 = vpop.f32.mrf.mxu0
      %v503 = vadd.f32 0.0, %v502
      %504 = vmatmul.f32.gmra.mxu0 %v393
      %v505 = vpop.f32.mrf.mxu0
      %v506 = vadd.f32 0.0, %v505
      %507 = vmatmul.f32.gmra.mxu0 %v396
      %v508 = vpop.f32.mrf.mxu0
      %v509 = vadd.f32 0.0, %v508
      %510 = vmatmul.f32.gmra.mxu0 %v399
      %v511 = vpop.f32.mrf.mxu0
      %v512 = vadd.f32 0.0, %v511
      %513 = vmatmul.f32.gmra.mxu0 %v402
      %v514 = vpop.f32.mrf.mxu0
      %v515 = vadd.f32 0.0, %v514
      %516 = vmatmul.f32.gmra.mxu0 %v405
      %v517 = vpop.f32.mrf.mxu0
      %v518 = vadd.f32 0.0, %v517
      %519 = vdwg.mxu0
      %v520 = vsel %vm310, %v473, 0.0
      %v521 = vsel %vm311, %v476, 0.0
      %v522 = vsel %vm312, %v479, 0.0
      %v523 = vsel %vm313, %v482, 0.0
      %v524 = vsel %vm314, %v485, 0.0
      %v525 = vsel %vm315, %v488, 0.0
      %v526 = vsel %vm316, %v491, 0.0
      %v527 = vsel %vm317, %v494, 0.0
      %v528 = vsel %vm318, %v497, 0.0
      %v529 = vsel %vm319, %v500, 0.0
      %v530 = vsel %vm320, %v503, 0.0
      %v531 = vsel %vm321, %v506, 0.0
      %v532 = vsel %vm322, %v509, 0.0
      %v533 = vsel %vm323, %v512, 0.0
      %v534 = vsel %vm324, %v515, 0.0
      %v535 = vsel %vm325, %v518, 0.0
      %vm536 = vcmp.ne.f32.partialorder %v520, 0.0
      %vm537 = vcmp.ne.f32.partialorder %v521, 0.0
      %vm538 = vcmp.ne.f32.partialorder %v522, 0.0
      %vm539 = vcmp.ne.f32.partialorder %v523, 0.0
      %vm540 = vcmp.ne.f32.partialorder %v524, 0.0
      %vm541 = vcmp.ne.f32.partialorder %v525, 0.0
      %vm542 = vcmp.ne.f32.partialorder %v526, 0.0
      %vm543 = vcmp.ne.f32.partialorder %v527, 0.0
      %vm544 = vcmp.ne.f32.partialorder %v528, 0.0
      %vm545 = vcmp.ne.f32.partialorder %v529, 0.0
      %vm546 = vcmp.ne.f32.partialorder %v530, 0.0
      %vm547 = vcmp.ne.f32.partialorder %v531, 0.0
      %vm548 = vcmp.ne.f32.partialorder %v532, 0.0
      %vm549 = vcmp.ne.f32.partialorder %v533, 0.0
      %vm550 = vcmp.ne.f32.partialorder %v534, 0.0
      %vm551 = vcmp.ne.f32.partialorder %v535, 0.0
      %vm552 = vmor %vm536, %vm342
      %vm553 = vmor %vm537, %vm343
      %vm554 = vmor %vm538, %vm344
      %vm555 = vmor %vm539, %vm345
      %vm556 = vmor %vm540, %vm346
      %vm557 = vmor %vm541, %vm347
      %vm558 = vmor %vm542, %vm348
      %vm559 = vmor %vm543, %vm349
      %vm560 = vmor %vm544, %vm350
      %vm561 = vmor %vm545, %vm351
      %vm562 = vmor %vm546, %vm352
      %vm563 = vmor %vm547, %vm353
      %vm564 = vmor %vm548, %vm354
      %vm565 = vmor %vm549, %vm355
      %vm566 = vmor %vm550, %vm356
      %vm567 = vmor %vm551, %vm357
      %v568 = vsel %vm552, 1.0, 0.0
      %v569 = vsel %vm553, 1.0, 0.0
      %v570 = vsel %vm554, 1.0, 0.0
      %v571 = vsel %vm555, 1.0, 0.0
      %v572 = vsel %vm556, 1.0, 0.0
      %v573 = vsel %vm557, 1.0, 0.0
      %v574 = vsel %vm558, 1.0, 0.0
      %v575 = vsel %vm559, 1.0, 0.0
      %v576 = vsel %vm560, 1.0, 0.0
      %v577 = vsel %vm561, 1.0, 0.0
      %v578 = vsel %vm562, 1.0, 0.0
      %v579 = vsel %vm563, 1.0, 0.0
      %v580 = vsel %vm564, 1.0, 0.0
      %v581 = vsel %vm565, 1.0, 0.0
      %v582 = vsel %vm566, 1.0, 0.0
      %v583 = vsel %vm567, 1.0, 0.0
      %584 = vadd.xlane.f32.xlu0 %v568
      %v585 = vpop.xlane.xlu0 %584
      %586 = vadd.xlane.f32.xlu0 %v569
      %v587 = vpop.xlane.xlu0 %586
      %588 = vadd.xlane.f32.xlu0 %v570
      %v589 = vpop.xlane.xlu0 %588
      %590 = vadd.xlane.f32.xlu0 %v571
      %v591 = vpop.xlane.xlu0 %590
      %592 = vadd.xlane.f32.xlu0 %v572
      %v593 = vpop.xlane.xlu0 %592
      %594 = vadd.xlane.f32.xlu0 %v573
      %v595 = vpop.xlane.xlu0 %594
      %596 = vadd.xlane.f32.xlu0 %v574
      %v597 = vpop.xlane.xlu0 %596
      %598 = vadd.xlane.f32.xlu0 %v575
      %v599 = vpop.xlane.xlu0 %598
      %600 = vadd.xlane.f32.xlu0 %v576
      %v601 = vpop.xlane.xlu0 %600
      %602 = vadd.xlane.f32.xlu0 %v577
      %v603 = vpop.xlane.xlu0 %602
      %604 = vadd.xlane.f32.xlu0 %v578
      %v605 = vpop.xlane.xlu0 %604
      %606 = vadd.xlane.f32.xlu0 %v579
      %v607 = vpop.xlane.xlu0 %606
      %608 = vadd.xlane.f32.xlu0 %v580
      %v609 = vpop.xlane.xlu0 %608
      %610 = vadd.xlane.f32.xlu0 %v581
      %v611 = vpop.xlane.xlu0 %610
      %612 = vadd.xlane.f32.xlu0 %v582
      %v613 = vpop.xlane.xlu0 %612
      %614 = vadd.xlane.f32.xlu0 %v583
      %v615 = vpop.xlane.xlu0 %614
      %v616 = vrsqrt.pop %v585
      %v617 = vmul.f32 %v616, %v585
      %v618 = vmul.f32 %v617, %v616
      %v619 = vmul.f32 0.5, %v618
      %v620 = vsub.f32 1.5, %v619
      %v621 = vmul.f32 %v616, %v620
      %vm622 = vweird.f32 %v585
      %vm623 = vweird.f32 %v616
      %vm624 = vmor %vm622, %vm623
      %v625 = vsel %vm624, %v616, %v621
      %v626 = vrsqrt.pop %v587
      %v627 = vmul.f32 %v626, %v587
      %v628 = vmul.f32 %v627, %v626
      %v629 = vmul.f32 0.5, %v628
      %v630 = vsub.f32 1.5, %v629
      %v631 = vmul.f32 %v626, %v630
      %vm632 = vweird.f32 %v587
      %vm633 = vweird.f32 %v626
      %vm634 = vmor %vm632, %vm633
      %v635 = vsel %vm634, %v626, %v631
      %v636 = vrsqrt.pop %v589
      %v637 = vmul.f32 %v636, %v589
      %v638 = vmul.f32 %v637, %v636
      %v639 = vmul.f32 0.5, %v638
      %v640 = vsub.f32 1.5, %v639
      %v641 = vmul.f32 %v636, %v640
      %vm642 = vweird.f32 %v589
      %vm643 = vweird.f32 %v636
      %vm644 = vmor %vm642, %vm643
      %v645 = vsel %vm644, %v636, %v641
      %v646 = vrsqrt.pop %v591
      %v647 = vmul.f32 %v646, %v591
      %v648 = vmul.f32 %v647, %v646
      %v649 = vmul.f32 0.5, %v648
      %v650 = vsub.f32 1.5, %v649
      %v651 = vmul.f32 %v646, %v650
      %vm652 = vweird.f32 %v591
      %vm653 = vweird.f32 %v646
      %vm654 = vmor %vm652, %vm653
      %v655 = vsel %vm654, %v646, %v651
      %v656 = vrsqrt.pop %v593
      %v657 = vmul.f32 %v656, %v593
      %v658 = vmul.f32 %v657, %v656
      %v659 = vmul.f32 0.5, %v658
      %v660 = vsub.f32 1.5, %v659
      %v661 = vmul.f32 %v656, %v660
      %vm662 = vweird.f32 %v593
      %vm663 = vweird.f32 %v656
      %vm664 = vmor %vm662, %vm663
      %v665 = vsel %vm664, %v656, %v661
      %v666 = vrsqrt.pop %v595
      %v667 = vmul.f32 %v666, %v595
      %v668 = vmul.f32 %v667, %v666
      %v669 = vmul.f32 0.5, %v668
      %v670 = vsub.f32 1.5, %v669
      %v671 = vmul.f32 %v666, %v670
      %vm672 = vweird.f32 %v595
      %vm673 = vweird.f32 %v666
      %vm674 = vmor %vm672, %vm673
      %v675 = vsel %vm674, %v666, %v671
      %v676 = vrsqrt.pop %v597
      %v677 = vmul.f32 %v676, %v597
      %v678 = vmul.f32 %v677, %v676
      %v679 = vmul.f32 0.5, %v678
      %v680 = vsub.f32 1.5, %v679
      %v681 = vmul.f32 %v676, %v680
      %vm682 = vweird.f32 %v597
      %vm683 = vweird.f32 %v676
      %vm684 = vmor %vm682, %vm683
      %v685 = vsel %vm684, %v676, %v681
      %v686 = vrsqrt.pop %v599
      %v687 = vmul.f32 %v686, %v599
      %v688 = vmul.f32 %v687, %v686
      %v689 = vmul.f32 0.5, %v688
      %v690 = vsub.f32 1.5, %v689
      %v691 = vmul.f32 %v686, %v690
      %vm692 = vweird.f32 %v599
      %vm693 = vweird.f32 %v686
      %vm694 = vmor %vm692, %vm693
      %v695 = vsel %vm694, %v686, %v691
      %v696 = vrsqrt.pop %v601
      %v697 = vmul.f32 %v696, %v601
      %v698 = vmul.f32 %v697, %v696
      %v699 = vmul.f32 0.5, %v698
      %v700 = vsub.f32 1.5, %v699
      %v701 = vmul.f32 %v696, %v700
      %vm702 = vweird.f32 %v601
      %vm703 = vweird.f32 %v696
      %vm704 = vmor %vm702, %vm703
      %v705 = vsel %vm704, %v696, %v701
      %v706 = vrsqrt.pop %v603
      %v707 = vmul.f32 %v706, %v603
      %v708 = vmul.f32 %v707, %v706
      %v709 = vmul.f32 0.5, %v708
      %v710 = vsub.f32 1.5, %v709
      %v711 = vmul.f32 %v706, %v710
      %vm712 = vweird.f32 %v603
      %vm713 = vweird.f32 %v706
      %vm714 = vmor %vm712, %vm713
      %v715 = vsel %vm714, %v706, %v711
      %v716 = vrsqrt.pop %v605
      %v717 = vmul.f32 %v716, %v605
      %v718 = vmul.f32 %v717, %v716
      %v719 = vmul.f32 0.5, %v718
      %v720 = vsub.f32 1.5, %v719
      %v721 = vmul.f32 %v716, %v720
      %vm722 = vweird.f32 %v605
      %vm723 = vweird.f32 %v716
      %vm724 = vmor %vm722, %vm723
      %v725 = vsel %vm724, %v716, %v721
      %v726 = vrsqrt.pop %v607
      %v727 = vmul.f32 %v726, %v607
      %v728 = vmul.f32 %v727, %v726
      %v729 = vmul.f32 0.5, %v728
      %v730 = vsub.f32 1.5, %v729
      %v731 = vmul.f32 %v726, %v730
      %vm732 = vweird.f32 %v607
      %vm733 = vweird.f32 %v726
      %vm734 = vmor %vm732, %vm733
      %v735 = vsel %vm734, %v726, %v731
      %v736 = vrsqrt.pop %v609
      %v737 = vmul.f32 %v736, %v609
      %v738 = vmul.f32 %v737, %v736
      %v739 = vmul.f32 0.5, %v738
      %v740 = vsub.f32 1.5, %v739
      %v741 = vmul.f32 %v736, %v740
      %vm742 = vweird.f32 %v609
      %vm743 = vweird.f32 %v736
      %vm744 = vmor %vm742, %vm743
      %v745 = vsel %vm744, %v736, %v741
      %v746 = vrsqrt.pop %v611
      %v747 = vmul.f32 %v746, %v611
      %v748 = vmul.f32 %v747, %v746
      %v749 = vmul.f32 0.5, %v748
      %v750 = vsub.f32 1.5, %v749
      %v751 = vmul.f32 %v746, %v750
      %vm752 = vweird.f32 %v611
      %vm753 = vweird.f32 %v746
      %vm754 = vmor %vm752, %vm753
      %v755 = vsel %vm754, %v746, %v751
      %v756 = vrsqrt.pop %v613
      %v757 = vmul.f32 %v756, %v613
      %v758 = vmul.f32 %v757, %v756
      %v759 = vmul.f32 0.5, %v758
      %v760 = vsub.f32 1.5, %v759
      %v761 = vmul.f32 %v756, %v760
      %vm762 = vweird.f32 %v613
      %vm763 = vweird.f32 %v756
      %vm764 = vmor %vm762, %vm763
      %v765 = vsel %vm764, %v756, %v761
      %v766 = vrsqrt.pop %v615
      %v767 = vmul.f32 %v766, %v615
      %v768 = vmul.f32 %v767, %v766
      %v769 = vmul.f32 0.5, %v768
      %v770 = vsub.f32 1.5, %v769
      %v771 = vmul.f32 %v766, %v770
      %vm772 = vweird.f32 %v615
      %vm773 = vweird.f32 %v766
      %vm774 = vmor %vm772, %vm773
      %v775 = vsel %vm774, %v766, %v771
      %v776 = vld [vmem:[%s0] sm:$0xff]
      %v777 = vld [vmem:[%s0 + $0x8] sm:$0xff]
      %v778 = vld [vmem:[%s0 + $0x10] sm:$0xff]
      %v779 = vld [vmem:[%s0 + $0x18] sm:$0xff]
      %v780 = vld [vmem:[%s0 + $0x20] sm:$0xff]
      %v781 = vld [vmem:[%s0 + $0x28] sm:$0x1]
      %v782 = vld [vmem:[%s0 + $0x29] sm:$0x1]
      %v783 = vld [vmem:[%s0 + $0x2a] sm:$0x1]
      %784 = vmatpush.msra.mxu0 0.0
      %785 = vmatpush.msra.mxu0 0.0
      %786 = vmatpush.msra.mxu0 0.0
      %787 = vmatpush.msra.mxu0 0.0
      %788 = vmatpush.msra.mxu0 0.0
      %789 = vmatpush.msra.mxu0 0.0
      %790 = vmatpush.msra.mxu0 0.0
      %791 = vmatpush.msra.mxu0 0.0
      %792 = vmatpush.msra.mxu0 0.0
      %793 = vmatpush.msra.mxu0 0.0
      %794 = vmatpush.msra.mxu0 0.0
      %795 = vmatpush.msra.mxu0 0.0
      %796 = vmatpush.msra.mxu0 0.0
      %797 = vmatpush.msra.mxu0 0.0
      %798 = vmatpush.msra.mxu0 %v777
      %799 = vmatpush.msra.mxu0 %v776
      %800 = vmatmul.f32.gmra.mxu0 %v360
      %v801 = vpop.f32.mrf.mxu0
      %v802 = vadd.f32 0.0, %v801
      %803 = vmatmul.f32.gmra.mxu0 %v363
      %v804 = vpop.f32.mrf.mxu0
      %v805 = vadd.f32 0.0, %v804
      %806 = vmatmul.f32.gmra.mxu0 %v366
      %v807 = vpop.f32.mrf.mxu0
      %v808 = vadd.f32 0.0, %v807
      %809 = vmatmul.f32.gmra.mxu0 %v369
      %v810 = vpop.f32.mrf.mxu0
      %v811 = vadd.f32 0.0, %v810
      %812 = vmatmul.f32.gmra.mxu0 %v372
      %v813 = vpop.f32.mrf.mxu0
      %v814 = vadd.f32 0.0, %v813
      %815 = vmatmul.f32.gmra.mxu0 %v375
      %v816 = vpop.f32.mrf.mxu0
      %v817 = vadd.f32 0.0, %v816
      %818 = vmatmul.f32.gmra.mxu0 %v378
      %v819 = vpop.f32.mrf.mxu0
      %v820 = vadd.f32 0.0, %v819
      %821 = vmatmul.f32.gmra.mxu0 %v381
      %v822 = vpop.f32.mrf.mxu0
      %v823 = vadd.f32 0.0, %v822
      %824 = vmatmul.f32.gmra.mxu0 %v384
      %v825 = vpop.f32.mrf.mxu0
      %v826 = vadd.f32 0.0, %v825
      %827 = vmatmul.f32.gmra.mxu0 %v387
      %v828 = vpop.f32.mrf.mxu0
      %v829 = vadd.f32 0.0, %v828
      %830 = vmatmul.f32.gmra.mxu0 %v390
      %v831 = vpop.f32.mrf.mxu0
      %v832 = vadd.f32 0.0, %v831
      %833 = vmatmul.f32.gmra.mxu0 %v393
      %v834 = vpop.f32.mrf.mxu0
      %v835 = vadd.f32 0.0, %v834
      %836 = vmatmul.f32.gmra.mxu0 %v396
      %v837 = vpop.f32.mrf.mxu0
      %v838 = vadd.f32 0.0, %v837
      %839 = vmatmul.f32.gmra.mxu0 %v399
      %v840 = vpop.f32.mrf.mxu0
      %v841 = vadd.f32 0.0, %v840
      %842 = vmatmul.f32.gmra.mxu0 %v402
      %v843 = vpop.f32.mrf.mxu0
      %v844 = vadd.f32 0.0, %v843
      %845 = vmatmul.f32.gmra.mxu0 %v405
      %v846 = vpop.f32.mrf.mxu0
      %v847 = vadd.f32 0.0, %v846
      %848 = vdwg.mxu0
      %v849 = vmul.f32 %v625, %v802
      %v850 = vmul.f32 %v635, %v805
      %v851 = vmul.f32 %v645, %v808
      %v852 = vmul.f32 %v655, %v811
      %v853 = vmul.f32 %v665, %v814
      %v854 = vmul.f32 %v675, %v817
      %v855 = vmul.f32 %v685, %v820
      %v856 = vmul.f32 %v695, %v823
      %v857 = vmul.f32 %v705, %v826
      %v858 = vmul.f32 %v715, %v829
      %v859 = vmul.f32 %v725, %v832
      %v860 = vmul.f32 %v735, %v835
      %v861 = vmul.f32 %v745, %v838
      %v862 = vmul.f32 %v755, %v841
      %v863 = vmul.f32 %v765, %v844
      %v864 = vmul.f32 %v775, %v847
      %865 = vmatpush.msra.mxu0 %v864
      %866 = vmatpush.msra.mxu0 %v863
      %867 = vmatpush.msra.mxu0 %v862
      %868 = vmatpush.msra.mxu0 %v861
      %869 = vmatpush.msra.mxu0 %v860
      %870 = vmatpush.msra.mxu0 %v859
      %871 = vmatpush.msra.mxu0 %v858
      %872 = vmatpush.msra.mxu0 %v857
      %873 = vmatpush.msra.mxu0 %v856
      %874 = vmatpush.msra.mxu0 %v855
      %875 = vmatpush.msra.mxu0 %v854
      %876 = vmatpush.msra.mxu0 %v853
      %877 = vmatpush.msra.mxu0 %v852
      %878 = vmatpush.msra.mxu0 %v851
      %879 = vmatpush.msra.mxu0 %v850
      %880 = vmatpush.msra.mxu0 %v849
      %881 = vmatmul.f32.gmra.mxu0 %v568
      %v882 = vpop.f32.mrf.mxu0
      %v883 = vadd.f32 0.0, %v882
      %884 = vmatmul.f32.gmra.mxu0 %v569
      %v885 = vpop.f32.mrf.mxu0
      %v886 = vadd.f32 0.0, %v885
      %887 = vmatmul.f32.gmra.mxu0 %v570
      %v888 = vpop.f32.mrf.mxu0
      %v889 = vadd.f32 0.0, %v888
      %890 = vmatmul.f32.gmra.mxu0 %v571
      %v891 = vpop.f32.mrf.mxu0
      %v892 = vadd.f32 0.0, %v891
      %893 = vmatmul.f32.gmra.mxu0 %v572
      %v894 = vpop.f32.mrf.mxu0
      %v895 = vadd.f32 0.0, %v894
      %896 = vmatmul.f32.gmra.mxu0 %v573
      %v897 = vpop.f32.mrf.mxu0
      %v898 = vadd.f32 0.0, %v897
      %899 = vmatmul.f32.gmra.mxu0 %v574
      %v900 = vpop.f32.mrf.mxu0
      %v901 = vadd.f32 0.0, %v900
      %902 = vmatmul.f32.gmra.mxu0 %v575
      %v903 = vpop.f32.mrf.mxu0
      %v904 = vadd.f32 0.0, %v903
      %905 = vmatmul.f32.gmra.mxu0 %v576
      %v906 = vpop.f32.mrf.mxu0
      %v907 = vadd.f32 0.0, %v906
      %908 = vmatmul.f32.gmra.mxu0 %v577
      %v909 = vpop.f32.mrf.mxu0
      %v910 = vadd.f32 0.0, %v909
      %911 = vmatmul.f32.gmra.mxu0 %v578
      %v912 = vpop.f32.mrf.mxu0
      %v913 = vadd.f32 0.0, %v912
      %914 = vmatmul.f32.gmra.mxu0 %v579
      %v915 = vpop.f32.mrf.mxu0
      %v916 = vadd.f32 0.0, %v915
      %917 = vmatmul.f32.gmra.mxu0 %v580
      %v918 = vpop.f32.mrf.mxu0
      %v919 = vadd.f32 0.0, %v918
      %920 = vmatmul.f32.gmra.mxu0 %v581
      %v921 = vpop.f32.mrf.mxu0
      %v922 = vadd.f32 0.0, %v921
      %923 = vmatmul.f32.gmra.mxu0 %v582
      %v924 = vpop.f32.mrf.mxu0
      %v925 = vadd.f32 0.0, %v924
      %926 = vmatmul.f32.gmra.mxu0 %v583
      %v927 = vpop.f32.mrf.mxu0
      %v928 = vadd.f32 0.0, %v927
      %929 = vdwg.mxu0
      %v930 = vmul.f32 %v625, %v883
      %v931 = vmul.f32 %v635, %v886
      %v932 = vmul.f32 %v645, %v889
      %v933 = vmul.f32 %v655, %v892
      %v934 = vmul.f32 %v665, %v895
      %v935 = vmul.f32 %v675, %v898
      %v936 = vmul.f32 %v685, %v901
      %v937 = vmul.f32 %v695, %v904
      %v938 = vmul.f32 %v705, %v907
      %v939 = vmul.f32 %v715, %v910
      %v940 = vmul.f32 %v725, %v913
      %v941 = vmul.f32 %v735, %v916
      %v942 = vmul.f32 %v745, %v919
      %v943 = vmul.f32 %v755, %v922
      %v944 = vmul.f32 %v765, %v925
      %v945 = vmul.f32 %v775, %v928
      %v946 = vperm.slane %v781, 0
      %v947 = vadd.f32 %v930, %v946
      %v948 = vadd.f32 %v931, %v946
      %v949 = vadd.f32 %v932, %v946
      %v950 = vadd.f32 %v933, %v946
      %v951 = vadd.f32 %v934, %v946
      %v952 = vadd.f32 %v935, %v946
      %v953 = vadd.f32 %v936, %v946
      %v954 = vadd.f32 %v937, %v946
      %v955 = vadd.f32 %v938, %v946
      %v956 = vadd.f32 %v939, %v946
      %v957 = vadd.f32 %v940, %v946
      %v958 = vadd.f32 %v941, %v946
      %v959 = vadd.f32 %v942, %v946
      %v960 = vadd.f32 %v943, %v946
      %v961 = vadd.f32 %v944, %v946
      %v962 = vadd.f32 %v945, %v946
      %v963 = vmax.f32 %v947, 0.0
      %v964 = vmax.f32 %v948, 0.0
      %v965 = vmax.f32 %v949, 0.0
      %v966 = vmax.f32 %v950, 0.0
      %v967 = vmax.f32 %v951, 0.0
      %v968 = vmax.f32 %v952, 0.0
      %v969 = vmax.f32 %v953, 0.0
      %v970 = vmax.f32 %v954, 0.0
      %v971 = vmax.f32 %v955, 0.0
      %v972 = vmax.f32 %v956, 0.0
      %v973 = vmax.f32 %v957, 0.0
      %v974 = vmax.f32 %v958, 0.0
      %v975 = vmax.f32 %v959, 0.0
      %v976 = vmax.f32 %v960, 0.0
      %v977 = vmax.f32 %v961, 0.0
      %v978 = vmax.f32 %v962, 0.0
      %v980 = vsel %vm358, %v963, 0
      %v983 = vsel %vm358, %v964, 0
      %v986 = vsel %vm358, %v965, 0
      %v989 = vsel %vm358, %v966, 0
      %v992 = vsel %vm358, %v967, 0
      %v995 = vsel %vm358, %v968, 0
      %v998 = vsel %vm358, %v969, 0
      %v1001 = vsel %vm358, %v970, 0
      %v1004 = vsel %vm358, %v971, 0
      %v1007 = vsel %vm358, %v972, 0
      %v1010 = vsel %vm358, %v973, 0
      %v1013 = vsel %vm358, %v974, 0
      %v1016 = vsel %vm358, %v975, 0
      %v1019 = vsel %vm358, %v976, 0
      %v1022 = vsel %vm358, %v977, 0
      %v1025 = vsel %vm358, %v978, 0
      %1027 = vmatpush.msra.mxu0 0.0
      %1028 = vmatpush.msra.mxu0 0.0
      %1029 = vmatpush.msra.mxu0 0.0
      %1030 = vmatpush.msra.mxu0 0.0
      %1031 = vmatpush.msra.mxu0 0.0
      %1032 = vmatpush.msra.mxu0 0.0
      %1033 = vmatpush.msra.mxu0 0.0
      %1034 = vmatpush.msra.mxu0 0.0
      %1035 = vmatpush.msra.mxu0 0.0
      %1036 = vmatpush.msra.mxu0 0.0
      %1037 = vmatpush.msra.mxu0 0.0
      %1038 = vmatpush.msra.mxu0 0.0
      %1039 = vmatpush.msra.mxu0 0.0
      %1040 = vmatpush.msra.mxu0 0.0
      %1041 = vmatpush.msra.mxu0 %v779
      %1042 = vmatpush.msra.mxu0 %v778
      %1043 = vmatmul.f32.gmra.mxu0 %v980
      %v1044 = vpop.f32.mrf.mxu0
      %v1045 = vadd.f32 0.0, %v1044
      %1046 = vmatmul.f32.gmra.mxu0 %v983
      %v1047 = vpop.f32.mrf.mxu0
      %v1048 = vadd.f32 0.0, %v1047
      %1049 = vmatmul.f32.gmra.mxu0 %v986
      %v1050 = vpop.f32.mrf.mxu0
      %v1051 = vadd.f32 0.0, %v1050
      %1052 = vmatmul.f32.gmra.mxu0 %v989
      %v1053 = vpop.f32.mrf.mxu0
      %v1054 = vadd.f32 0.0, %v1053
      %1055 = vmatmul.f32.gmra.mxu0 %v992
      %v1056 = vpop.f32.mrf.mxu0
      %v1057 = vadd.f32 0.0, %v1056
      %1058 = vmatmul.f32.gmra.mxu0 %v995
      %v1059 = vpop.f32.mrf.mxu0
      %v1060 = vadd.f32 0.0, %v1059
      %1061 = vmatmul.f32.gmra.mxu0 %v998
      %v1062 = vpop.f32.mrf.mxu0
      %v1063 = vadd.f32 0.0, %v1062
      %1064 = vmatmul.f32.gmra.mxu0 %v1001
      %v1065 = vpop.f32.mrf.mxu0
      %v1066 = vadd.f32 0.0, %v1065
      %1067 = vmatmul.f32.gmra.mxu0 %v1004
      %v1068 = vpop.f32.mrf.mxu0
      %v1069 = vadd.f32 0.0, %v1068
      %1070 = vmatmul.f32.gmra.mxu0 %v1007
      %v1071 = vpop.f32.mrf.mxu0
      %v1072 = vadd.f32 0.0, %v1071
      %1073 = vmatmul.f32.gmra.mxu0 %v1010
      %v1074 = vpop.f32.mrf.mxu0
      %v1075 = vadd.f32 0.0, %v1074
      %1076 = vmatmul.f32.gmra.mxu0 %v1013
      %v1077 = vpop.f32.mrf.mxu0
      %v1078 = vadd.f32 0.0, %v1077
      %1079 = vmatmul.f32.gmra.mxu0 %v1016
      %v1080 = vpop.f32.mrf.mxu0
      %v1081 = vadd.f32 0.0, %v1080
      %1082 = vmatmul.f32.gmra.mxu0 %v1019
      %v1083 = vpop.f32.mrf.mxu0
      %v1084 = vadd.f32 0.0, %v1083
      %1085 = vmatmul.f32.gmra.mxu0 %v1022
      %v1086 = vpop.f32.mrf.mxu0
      %v1087 = vadd.f32 0.0, %v1086
      %1088 = vmatmul.f32.gmra.mxu0 %v1025
      %v1089 = vpop.f32.mrf.mxu0
      %v1090 = vadd.f32 0.0, %v1089
      %1091 = vdwg.mxu0
      %v1092 = vmul.f32 %v625, %v1045
      %v1093 = vmul.f32 %v635, %v1048
      %v1094 = vmul.f32 %v645, %v1051
      %v1095 = vmul.f32 %v655, %v1054
      %v1096 = vmul.f32 %v665, %v1057
      %v1097 = vmul.f32 %v675, %v1060
      %v1098 = vmul.f32 %v685, %v1063
      %v1099 = vmul.f32 %v695, %v1066
      %v1100 = vmul.f32 %v705, %v1069
      %v1101 = vmul.f32 %v715, %v1072
      %v1102 = vmul.f32 %v725, %v1075
      %v1103 = vmul.f32 %v735, %v1078
      %v1104 = vmul.f32 %v745, %v1081
      %v1105 = vmul.f32 %v755, %v1084
      %v1106 = vmul.f32 %v765, %v1087
      %v1107 = vmul.f32 %v775, %v1090
      %1108 = vmatpush.msra.mxu0 %v1107
      %1109 = vmatpush.msra.mxu0 %v1106
      %1110 = vmatpush.msra.mxu0 %v1105
      %1111 = vmatpush.msra.mxu0 %v1104
      %1112 = vmatpush.msra.mxu0 %v1103
      %1113 = vmatpush.msra.mxu0 %v1102
      %1114 = vmatpush.msra.mxu0 %v1101
      %1115 = vmatpush.msra.mxu0 %v1100
      %1116 = vmatpush.msra.mxu0 %v1099
      %1117 = vmatpush.msra.mxu0 %v1098
      %1118 = vmatpush.msra.mxu0 %v1097
      %1119 = vmatpush.msra.mxu0 %v1096
      %1120 = vmatpush.msra.mxu0 %v1095
      %1121 = vmatpush.msra.mxu0 %v1094
      %1122 = vmatpush.msra.mxu0 %v1093
      %1123 = vmatpush.msra.mxu0 %v1092
      %1124 = vmatmul.f32.gmra.mxu0 %v568
      %v1125 = vpop.f32.mrf.mxu0
      %v1126 = vadd.f32 0.0, %v1125
      %1127 = vmatmul.f32.gmra.mxu0 %v569
      %v1128 = vpop.f32.mrf.mxu0
      %v1129 = vadd.f32 0.0, %v1128
      %1130 = vmatmul.f32.gmra.mxu0 %v570
      %v1131 = vpop.f32.mrf.mxu0
      %v1132 = vadd.f32 0.0, %v1131
      %1133 = vmatmul.f32.gmra.mxu0 %v571
      %v1134 = vpop.f32.mrf.mxu0
      %v1135 = vadd.f32 0.0, %v1134
      %1136 = vmatmul.f32.gmra.mxu0 %v572
      %v1137 = vpop.f32.mrf.mxu0
      %v1138 = vadd.f32 0.0, %v1137
      %1139 = vmatmul.f32.gmra.mxu0 %v573
      %v1140 = vpop.f32.mrf.mxu0
      %v1141 = vadd.f32 0.0, %v1140
      %1142 = vmatmul.f32.gmra.mxu0 %v574
      %v1143 = vpop.f32.mrf.mxu0
      %v1144 = vadd.f32 0.0, %v1143
      %1145 = vmatmul.f32.gmra.mxu0 %v575
      %v1146 = vpop.f32.mrf.mxu0
      %v1147 = vadd.f32 0.0, %v1146
      %1148 = vmatmul.f32.gmra.mxu0 %v576
      %v1149 = vpop.f32.mrf.mxu0
      %v1150 = vadd.f32 0.0, %v1149
      %1151 = vmatmul.f32.gmra.mxu0 %v577
      %v1152 = vpop.f32.mrf.mxu0
      %v1153 = vadd.f32 0.0, %v1152
      %1154 = vmatmul.f32.gmra.mxu0 %v578
      %v1155 = vpop.f32.mrf.mxu0
      %v1156 = vadd.f32 0.0, %v1155
      %1157 = vmatmul.f32.gmra.mxu0 %v579
      %v1158 = vpop.f32.mrf.mxu0
      %v1159 = vadd.f32 0.0, %v1158
      %1160 = vmatmul.f32.gmra.mxu0 %v580
      %v1161 = vpop.f32.mrf.mxu0
      %v1162 = vadd.f32 0.0, %v1161
      %1163 = vmatmul.f32.gmra.mxu0 %v581
      %v1164 = vpop.f32.mrf.mxu0
      %v1165 = vadd.f32 0.0, %v1164
      %1166 = vmatmul.f32.gmra.mxu0 %v582
      %v1167 = vpop.f32.mrf.mxu0
      %v1168 = vadd.f32 0.0, %v1167
      %1169 = vmatmul.f32.gmra.mxu0 %v583
      %v1170 = vpop.f32.mrf.mxu0
      %v1171 = vadd.f32 0.0, %v1170
      %1172 = vdwg.mxu0
      %v1173 = vmul.f32 %v625, %v1126
      %v1174 = vmul.f32 %v635, %v1129
      %v1175 = vmul.f32 %v645, %v1132
      %v1176 = vmul.f32 %v655, %v1135
      %v1177 = vmul.f32 %v665, %v1138
      %v1178 = vmul.f32 %v675, %v1141
      %v1179 = vmul.f32 %v685, %v1144
      %v1180 = vmul.f32 %v695, %v1147
      %v1181 = vmul.f32 %v705, %v1150
      %v1182 = vmul.f32 %v715, %v1153
      %v1183 = vmul.f32 %v725, %v1156
      %v1184 = vmul.f32 %v735, %v1159
      %v1185 = vmul.f32 %v745, %v1162
      %v1186 = vmul.f32 %v755, %v1165
      %v1187 = vmul.f32 %v765, %v1168
      %v1188 = vmul.f32 %v775, %v1171
      %v1189 = vperm.slane %v782, 0
      %v1190 = vadd.f32 %v1173, %v1189
      %v1191 = vadd.f32 %v1174, %v1189
      %v1192 = vadd.f32 %v1175, %v1189
      %v1193 = vadd.f32 %v1176, %v1189
      %v1194 = vadd.f32 %v1177, %v1189
      %v1195 = vadd.f32 %v1178, %v1189
      %v1196 = vadd.f32 %v1179, %v1189
      %v1197 = vadd.f32 %v1180, %v1189
      %v1198 = vadd.f32 %v1181, %v1189
      %v1199 = vadd.f32 %v1182, %v1189
      %v1200 = vadd.f32 %v1183, %v1189
      %v1201 = vadd.f32 %v1184, %v1189
      %v1202 = vadd.f32 %v1185, %v1189
      %v1203 = vadd.f32 %v1186, %v1189
      %v1204 = vadd.f32 %v1187, %v1189
      %v1205 = vadd.f32 %v1188, %v1189
      %v1206 = vmax.f32 %v1190, 0.0
      %v1207 = vmax.f32 %v1191, 0.0
      %v1208 = vmax.f32 %v1192, 0.0
      %v1209 = vmax.f32 %v1193, 0.0
      %v1210 = vmax.f32 %v1194, 0.0
      %v1211 = vmax.f32 %v1195, 0.0
      %v1212 = vmax.f32 %v1196, 0.0
      %v1213 = vmax.f32 %v1197, 0.0
      %v1214 = vmax.f32 %v1198, 0.0
      %v1215 = vmax.f32 %v1199, 0.0
      %v1216 = vmax.f32 %v1200, 0.0
      %v1217 = vmax.f32 %v1201, 0.0
      %v1218 = vmax.f32 %v1202, 0.0
      %v1219 = vmax.f32 %v1203, 0.0
      %v1220 = vmax.f32 %v1204, 0.0
      %v1221 = vmax.f32 %v1205, 0.0
      %vm1222 = vcmask 64512
      %v1224 = vsel %vm1222, %v1206, 0
      %v1227 = vsel %vm1222, %v1207, 0
      %v1230 = vsel %vm1222, %v1208, 0
      %v1233 = vsel %vm1222, %v1209, 0
      %v1236 = vsel %vm1222, %v1210, 0
      %v1239 = vsel %vm1222, %v1211, 0
      %v1242 = vsel %vm1222, %v1212, 0
      %v1245 = vsel %vm1222, %v1213, 0
      %v1248 = vsel %vm1222, %v1214, 0
      %v1251 = vsel %vm1222, %v1215, 0
      %v1254 = vsel %vm1222, %v1216, 0
      %v1257 = vsel %vm1222, %v1217, 0
      %v1260 = vsel %vm1222, %v1218, 0
      %v1263 = vsel %vm1222, %v1219, 0
      %v1266 = vsel %vm1222, %v1220, 0
      %v1269 = vsel %vm1222, %v1221, 0
      %1271 = vmatpush.msra.mxu0 0.0
      %1272 = vmatpush.msra.mxu0 0.0
      %1273 = vmatpush.msra.mxu0 0.0
      %1274 = vmatpush.msra.mxu0 0.0
      %1275 = vmatpush.msra.mxu0 0.0
      %1276 = vmatpush.msra.mxu0 0.0
      %1277 = vmatpush.msra.mxu0 0.0
      %1278 = vmatpush.msra.mxu0 0.0
      %1279 = vmatpush.msra.mxu0 0.0
      %1280 = vmatpush.msra.mxu0 0.0
      %1281 = vmatpush.msra.mxu0 0.0
      %1282 = vmatpush.msra.mxu0 0.0
      %1283 = vmatpush.msra.mxu0 0.0
      %1284 = vmatpush.msra.mxu0 0.0
      %1285 = vmatpush.msra.mxu0 0.0
      %1286 = vmatpush.msra.mxu0 %v780
      %1287 = vmatmul.f32.gmra.mxu0 %v1224
      %v1288 = vpop.f32.mrf.mxu0
      %v1289 = vadd.f32 0.0, %v1288
      %1290 = vmatmul.f32.gmra.mxu0 %v1227
      %v1291 = vpop.f32.mrf.mxu0
      %v1292 = vadd.f32 0.0, %v1291
      %1293 = vmatmul.f32.gmra.mxu0 %v1230
      %v1294 = vpop.f32.mrf.mxu0
      %v1295 = vadd.f32 0.0, %v1294
      %1296 = vmatmul.f32.gmra.mxu0 %v1233
      %v1297 = vpop.f32.mrf.mxu0
      %v1298 = vadd.f32 0.0, %v1297
      %1299 = vmatmul.f32.gmra.mxu0 %v1236
      %v1300 = vpop.f32.mrf.mxu0
      %v1301 = vadd.f32 0.0, %v1300
      %1302 = vmatmul.f32.gmra.mxu0 %v1239
      %v1303 = vpop.f32.mrf.mxu0
      %v1304 = vadd.f32 0.0, %v1303
      %1305 = vmatmul.f32.gmra.mxu0 %v1242
      %v1306 = vpop.f32.mrf.mxu0
      %v1307 = vadd.f32 0.0, %v1306
      %1308 = vmatmul.f32.gmra.mxu0 %v1245
      %v1309 = vpop.f32.mrf.mxu0
      %v1310 = vadd.f32 0.0, %v1309
      %1311 = vmatmul.f32.gmra.mxu0 %v1248
      %v1312 = vpop.f32.mrf.mxu0
      %v1313 = vadd.f32 0.0, %v1312
      %1314 = vmatmul.f32.gmra.mxu0 %v1251
      %v1315 = vpop.f32.mrf.mxu0
      %v1316 = vadd.f32 0.0, %v1315
      %1317 = vmatmul.f32.gmra.mxu0 %v1254
      %v1318 = vpop.f32.mrf.mxu0
      %v1319 = vadd.f32 0.0, %v1318
      %1320 = vmatmul.f32.gmra.mxu0 %v1257
      %v1321 = vpop.f32.mrf.mxu0
      %v1322 = vadd.f32 0.0, %v1321
      %1323 = vmatmul.f32.gmra.mxu0 %v1260
      %v1324 = vpop.f32.mrf.mxu0
      %v1325 = vadd.f32 0.0, %v1324
      %1326 = vmatmul.f32.gmra.mxu0 %v1263
      %v1327 = vpop.f32.mrf.mxu0
      %v1328 = vadd.f32 0.0, %v1327
      %1329 = vmatmul.f32.gmra.mxu0 %v1266
      %v1330 = vpop.f32.mrf.mxu0
      %v1331 = vadd.f32 0.0, %v1330
      %1332 = vmatmul.f32.gmra.mxu0 %v1269
      %v1333 = vpop.f32.mrf.mxu0
      %v1334 = vadd.f32 0.0, %v1333
      %1335 = vdwg.mxu0
      %1337 = vset.pattern.permute.xlu0 0
      %1338 = vperm.xlu0 %1337, %v1289
      %v1339 = vpop.permute.xlu0 %1338
      %1342 = vset.pattern.permute.xlu0 0
      %1343 = vperm.xlu0 %1342, %v1292
      %v1344 = vpop.permute.xlu0 %1343
      %1347 = vset.pattern.permute.xlu0 0
      %1348 = vperm.xlu0 %1347, %v1295
      %v1349 = vpop.permute.xlu0 %1348
      %1352 = vset.pattern.permute.xlu0 0
      %1353 = vperm.xlu0 %1352, %v1298
      %v1354 = vpop.permute.xlu0 %1353
      %1357 = vset.pattern.permute.xlu0 0
      %1358 = vperm.xlu0 %1357, %v1301
      %v1359 = vpop.permute.xlu0 %1358
      %1362 = vset.pattern.permute.xlu0 0
      %1363 = vperm.xlu0 %1362, %v1304
      %v1364 = vpop.permute.xlu0 %1363
      %1367 = vset.pattern.permute.xlu0 0
      %1368 = vperm.xlu0 %1367, %v1307
      %v1369 = vpop.permute.xlu0 %1368
      %1372 = vset.pattern.permute.xlu0 0
      %1373 = vperm.xlu0 %1372, %v1310
      %v1374 = vpop.permute.xlu0 %1373
      %1377 = vset.pattern.permute.xlu0 0
      %1378 = vperm.xlu0 %1377, %v1313
      %v1379 = vpop.permute.xlu0 %1378
      %1382 = vset.pattern.permute.xlu0 0
      %1383 = vperm.xlu0 %1382, %v1316
      %v1384 = vpop.permute.xlu0 %1383
      %1387 = vset.pattern.permute.xlu0 0
      %1388 = vperm.xlu0 %1387, %v1319
      %v1389 = vpop.permute.xlu0 %1388
      %1392 = vset.pattern.permute.xlu0 0
      %1393 = vperm.xlu0 %1392, %v1322
      %v1394 = vpop.permute.xlu0 %1393
      %1397 = vset.pattern.permute.xlu0 0
      %1398 = vperm.xlu0 %1397, %v1325
      %v1399 = vpop.permute.xlu0 %1398
      %1402 = vset.pattern.permute.xlu0 0
      %1403 = vperm.xlu0 %1402, %v1328
      %v1404 = vpop.permute.xlu0 %1403
      %1407 = vset.pattern.permute.xlu0 0
      %1408 = vperm.xlu0 %1407, %v1331
      %v1409 = vpop.permute.xlu0 %1408
      %1412 = vset.pattern.permute.xlu0 0
      %1413 = vperm.xlu0 %1412, %v1334
      %v1414 = vpop.permute.xlu0 %1413
      %v1416 = vmul.f32 %v1339, %v214
      %v1417 = vmul.f32 %v1344, %v215
      %v1418 = vmul.f32 %v1349, %v216
      %v1419 = vmul.f32 %v1354, %v217
      %v1420 = vmul.f32 %v1359, %v218
      %v1421 = vmul.f32 %v1364, %v219
      %v1422 = vmul.f32 %v1369, %v220
      %v1423 = vmul.f32 %v1374, %v221
      %v1424 = vmul.f32 %v1379, %v222
      %v1425 = vmul.f32 %v1384, %v223
      %v1426 = vmul.f32 %v1389, %v224
      %v1427 = vmul.f32 %v1394, %v225
      %v1428 = vmul.f32 %v1399, %v226
      %v1429 = vmul.f32 %v1404, %v227
      %v1430 = vmul.f32 %v1409, %v228
      %v1431 = vmul.f32 %v1414, %v229
      %1432 = vset.pattern.permute.xlu0 1
      %1433 = vperm.xlu0 %1432, %v1289
      %v1434 = vpop.permute.xlu0 %1433
      %1436 = vset.pattern.permute.xlu0 1
      %1437 = vperm.xlu0 %1436, %v1292
      %v1438 = vpop.permute.xlu0 %1437
      %1440 = vset.pattern.permute.xlu0 1
      %1441 = vperm.xlu0 %1440, %v1295
      %v1442 = vpop.permute.xlu0 %1441
      %1444 = vset.pattern.permute.xlu0 1
      %1445 = vperm.xlu0 %1444, %v1298
      %v1446 = vpop.permute.xlu0 %1445
      %1448 = vset.pattern.permute.xlu0 1
      %1449 = vperm.xlu0 %1448, %v1301
      %v1450 = vpop.permute.xlu0 %1449
      %1452 = vset.pattern.permute.xlu0 1
      %1453 = vperm.xlu0 %1452, %v1304
      %v1454 = vpop.permute.xlu0 %1453
      %1456 = vset.pattern.permute.xlu0 1
      %1457 = vperm.xlu0 %1456, %v1307
      %v1458 = vpop.permute.xlu0 %1457
      %1460 = vset.pattern.permute.xlu0 1
      %1461 = vperm.xlu0 %1460, %v1310
      %v1462 = vpop.permute.xlu0 %1461
      %1464 = vset.pattern.permute.xlu0 1
      %1465 = vperm.xlu0 %1464, %v1313
      %v1466 = vpop.permute.xlu0 %1465
      %1468 = vset.pattern.permute.xlu0 1
      %1469 = vperm.xlu0 %1468, %v1316
      %v1470 = vpop.permute.xlu0 %1469
      %1472 = vset.pattern.permute.xlu0 1
      %1473 = vperm.xlu0 %1472, %v1319
      %v1474 = vpop.permute.xlu0 %1473
      %1476 = vset.pattern.permute.xlu0 1
      %1477 = vperm.xlu0 %1476, %v1322
      %v1478 = vpop.permute.xlu0 %1477
      %1480 = vset.pattern.permute.xlu0 1
      %1481 = vperm.xlu0 %1480, %v1325
      %v1482 = vpop.permute.xlu0 %1481
      %1484 = vset.pattern.permute.xlu0 1
      %1485 = vperm.xlu0 %1484, %v1328
      %v1486 = vpop.permute.xlu0 %1485
      %1488 = vset.pattern.permute.xlu0 1
      %1489 = vperm.xlu0 %1488, %v1331
      %v1490 = vpop.permute.xlu0 %1489
      %1492 = vset.pattern.permute.xlu0 1
      %1493 = vperm.xlu0 %1492, %v1334
      %v1494 = vpop.permute.xlu0 %1493
      %v1496 = vmul.f32 %v1434, %v214
      %v1497 = vmul.f32 %v1438, %v215
      %v1498 = vmul.f32 %v1442, %v216
      %v1499 = vmul.f32 %v1446, %v217
      %v1500 = vmul.f32 %v1450, %v218
      %v1501 = vmul.f32 %v1454, %v219
      %v1502 = vmul.f32 %v1458, %v220
      %v1503 = vmul.f32 %v1462, %v221
      %v1504 = vmul.f32 %v1466, %v222
      %v1505 = vmul.f32 %v1470, %v223
      %v1506 = vmul.f32 %v1474, %v224
      %v1507 = vmul.f32 %v1478, %v225
      %v1508 = vmul.f32 %v1482, %v226
      %v1509 = vmul.f32 %v1486, %v227
      %v1510 = vmul.f32 %v1490, %v228
      %v1511 = vmul.f32 %v1494, %v229
      %1512 = vmatpush.msra.mxu0 %v1511
      %1513 = vmatpush.msra.mxu0 %v1510
      %1514 = vmatpush.msra.mxu0 %v1509
      %1515 = vmatpush.msra.mxu0 %v1508
      %1516 = vmatpush.msra.mxu0 %v1507
      %1517 = vmatpush.msra.mxu0 %v1506
      %1518 = vmatpush.msra.mxu0 %v1505
      %1519 = vmatpush.msra.mxu0 %v1504
      %1520 = vmatpush.msra.mxu0 %v1503
      %1521 = vmatpush.msra.mxu0 %v1502
      %1522 = vmatpush.msra.mxu0 %v1501
      %1523 = vmatpush.msra.mxu0 %v1500
      %1524 = vmatpush.msra.mxu0 %v1499
      %1525 = vmatpush.msra.mxu0 %v1498
      %1526 = vmatpush.msra.mxu0 %v1497
      %1527 = vmatpush.msra.mxu0 %v1496
      %1528 = vmatmul.f32.gmra.mxu0 %v326
      %v1529 = vpop.f32.mrf.mxu0
      %v1530 = vadd.f32 0.0, %v1529
      %1531 = vmatmul.f32.gmra.mxu0 %v327
      %v1532 = vpop.f32.mrf.mxu0
      %v1533 = vadd.f32 0.0, %v1532
      %1534 = vmatmul.f32.gmra.mxu0 %v328
      %v1535 = vpop.f32.mrf.mxu0
      %v1536 = vadd.f32 0.0, %v1535
      %1537 = vmatmul.f32.gmra.mxu0 %v329
      %v1538 = vpop.f32.mrf.mxu0
      %v1539 = vadd.f32 0.0, %v1538
      %1540 = vmatmul.f32.gmra.mxu0 %v330
      %v1541 = vpop.f32.mrf.mxu0
      %v1542 = vadd.f32 0.0, %v1541
      %1543 = vmatmul.f32.gmra.mxu0 %v331
      %v1544 = vpop.f32.mrf.mxu0
      %v1545 = vadd.f32 0.0, %v1544
      %1546 = vmatmul.f32.gmra.mxu0 %v332
      %v1547 = vpop.f32.mrf.mxu0
      %v1548 = vadd.f32 0.0, %v1547
      %1549 = vmatmul.f32.gmra.mxu0 %v333
      %v1550 = vpop.f32.mrf.mxu0
      %v1551 = vadd.f32 0.0, %v1550
      %1552 = vmatmul.f32.gmra.mxu0 %v334
      %v1553 = vpop.f32.mrf.mxu0
      %v1554 = vadd.f32 0.0, %v1553
      %1555 = vmatmul.f32.gmra.mxu0 %v335
      %v1556 = vpop.f32.mrf.mxu0
      %v1557 = vadd.f32 0.0, %v1556
      %1558 = vmatmul.f32.gmra.mxu0 %v336
      %v1559 = vpop.f32.mrf.mxu0
      %v1560 = vadd.f32 0.0, %v1559
      %1561 = vmatmul.f32.gmra.mxu0 %v337
      %v1562 = vpop.f32.mrf.mxu0
      %v1563 = vadd.f32 0.0, %v1562
      %1564 = vmatmul.f32.gmra.mxu0 %v338
      %v1565 = vpop.f32.mrf.mxu0
      %v1566 = vadd.f32 0.0, %v1565
      %1567 = vmatmul.f32.gmra.mxu0 %v339
      %v1568 = vpop.f32.mrf.mxu0
      %v1569 = vadd.f32 0.0, %v1568
      %1570 = vmatmul.f32.gmra.mxu0 %v340
      %v1571 = vpop.f32.mrf.mxu0
      %v1572 = vadd.f32 0.0, %v1571
      %1573 = vmatmul.f32.gmra.mxu0 %v341
      %v1574 = vpop.f32.mrf.mxu0
      %v1575 = vadd.f32 0.0, %v1574
      %1576 = vdwg.mxu0
      %v1577 = vadd.f32 %v1339, %v1530
      %v1578 = vadd.f32 %v1344, %v1533
      %v1579 = vadd.f32 %v1349, %v1536
      %v1580 = vadd.f32 %v1354, %v1539
      %v1581 = vadd.f32 %v1359, %v1542
      %v1582 = vadd.f32 %v1364, %v1545
      %v1583 = vadd.f32 %v1369, %v1548
      %v1584 = vadd.f32 %v1374, %v1551
      %v1585 = vadd.f32 %v1379, %v1554
      %v1586 = vadd.f32 %v1384, %v1557
      %v1587 = vadd.f32 %v1389, %v1560
      %v1588 = vadd.f32 %v1394, %v1563
      %v1589 = vadd.f32 %v1399, %v1566
      %v1590 = vadd.f32 %v1404, %v1569
      %v1591 = vadd.f32 %v1409, %v1572
      %v1592 = vadd.f32 %v1414, %v1575
      %s1594 = vtos %v783
      %v1595 = vstv %s1594
      %v1597 = vadd.f32 %v1577, %v1595
      %v1598 = vadd.f32 %v1578, %v1595
      %v1599 = vadd.f32 %v1579, %v1595
      %v1600 = vadd.f32 %v1580, %v1595
      %v1601 = vadd.f32 %v1581, %v1595
      %v1602 = vadd.f32 %v1582, %v1595
      %v1603 = vadd.f32 %v1583, %v1595
      %v1604 = vadd.f32 %v1584, %v1595
      %v1605 = vadd.f32 %v1585, %v1595
      %v1606 = vadd.f32 %v1586, %v1595
      %v1607 = vadd.f32 %v1587, %v1595
      %v1608 = vadd.f32 %v1588, %v1595
      %v1609 = vadd.f32 %v1589, %v1595
      %v1610 = vadd.f32 %v1590, %v1595
      %v1611 = vadd.f32 %v1591, %v1595
      %v1612 = vadd.f32 %v1592, %v1595
      %v1613 = vxor.u32 %v1597, 2147483648
      %v1614 = vxor.u32 %v1598, 2147483648
      %v1615 = vxor.u32 %v1599, 2147483648
      %v1616 = vxor.u32 %v1600, 2147483648
      %v1617 = vxor.u32 %v1601, 2147483648
      %v1618 = vxor.u32 %v1602, 2147483648
      %v1619 = vxor.u32 %v1603, 2147483648
      %v1620 = vxor.u32 %v1604, 2147483648
      %v1621 = vxor.u32 %v1605, 2147483648
      %v1622 = vxor.u32 %v1606, 2147483648
      %v1623 = vxor.u32 %v1607, 2147483648
      %v1624 = vxor.u32 %v1608, 2147483648
      %v1625 = vxor.u32 %v1609, 2147483648
      %v1626 = vxor.u32 %v1610, 2147483648
      %v1627 = vxor.u32 %v1611, 2147483648
      %v1628 = vxor.u32 %v1612, 2147483648
      %v1629 = vmul.f32 %v1613, 1.442695
      %v1630 = vpow.pop %v1629
      %v1631 = vmul.f32 %v1614, 1.442695
      %v1632 = vpow.pop %v1631
      %v1633 = vmul.f32 %v1615, 1.442695
      %v1634 = vpow.pop %v1633
      %v1635 = vmul.f32 %v1616, 1.442695
      %v1636 = vpow.pop %v1635
      %v1637 = vmul.f32 %v1617, 1.442695
      %v1638 = vpow.pop %v1637
      %v1639 = vmul.f32 %v1618, 1.442695
      %v1640 = vpow.pop %v1639
      %v1641 = vmul.f32 %v1619, 1.442695
      %v1642 = vpow.pop %v1641
      %v1643 = vmul.f32 %v1620, 1.442695
      %v1644 = vpow.pop %v1643
      %v1645 = vmul.f32 %v1621, 1.442695
      %v1646 = vpow.pop %v1645
      %v1647 = vmul.f32 %v1622, 1.442695
      %v1648 = vpow.pop %v1647
      %v1649 = vmul.f32 %v1623, 1.442695
      %v1650 = vpow.pop %v1649
      %v1651 = vmul.f32 %v1624, 1.442695
      %v1652 = vpow.pop %v1651
      %v1653 = vmul.f32 %v1625, 1.442695
      %v1654 = vpow.pop %v1653
      %v1655 = vmul.f32 %v1626, 1.442695
      %v1656 = vpow.pop %v1655
      %v1657 = vmul.f32 %v1627, 1.442695
      %v1658 = vpow.pop %v1657
      %v1659 = vmul.f32 %v1628, 1.442695
      %v1660 = vpow.pop %v1659
      %v1661 = vadd.f32 %v1630, 1.0
      %v1662 = vadd.f32 %v1632, 1.0
      %v1663 = vadd.f32 %v1634, 1.0
      %v1664 = vadd.f32 %v1636, 1.0
      %v1665 = vadd.f32 %v1638, 1.0
      %v1666 = vadd.f32 %v1640, 1.0
      %v1667 = vadd.f32 %v1642, 1.0
      %v1668 = vadd.f32 %v1644, 1.0
      %v1669 = vadd.f32 %v1646, 1.0
      %v1670 = vadd.f32 %v1648, 1.0
      %v1671 = vadd.f32 %v1650, 1.0
      %v1672 = vadd.f32 %v1652, 1.0
      %v1673 = vadd.f32 %v1654, 1.0
      %v1674 = vadd.f32 %v1656, 1.0
      %v1675 = vadd.f32 %v1658, 1.0
      %v1676 = vadd.f32 %v1660, 1.0
      %v1677 = vrcp.pop %v1661
      %v1678 = vmul.f32 %v1661, %v1677
      %v1679 = vsub.f32 1.0, %v1678
      %v1680 = vmul.f32 %v1677, %v1679
      %v1681 = vadd.f32 %v1677, %v1680
      %vm1682 = vweird.f32 %v1661
      %vm1683 = vweird.f32 %v1677
      %vm1684 = vmor %vm1682, %vm1683
      %v1685 = vsel %vm1684, %v1677, %v1681
      %v1686 = vand.u32 2147483647, %v1661
      %vm1687 = vcmp.eq.f32.partialorder %v1686, 8.507059e+37
      %v1688 = vand.u32 %v1661, 2147483648
      %v1689 = vor.u32 1.1754944e-38, %v1688
      %v1690 = vsel %vm1687, %v1689, %v1685
      %v1691 = vmul.f32 1.0, %v1690
      %v1692 = vrcp.pop %v1662
      %v1693 = vmul.f32 %v1662, %v1692
      %v1694 = vsub.f32 1.0, %v1693
      %v1695 = vmul.f32 %v1692, %v1694
      %v1696 = vadd.f32 %v1692, %v1695
      %vm1697 = vweird.f32 %v1662
      %vm1698 = vweird.f32 %v1692
      %vm1699 = vmor %vm1697, %vm1698
      %v1700 = vsel %vm1699, %v1692, %v1696
      %v1701 = vand.u32 2147483647, %v1662
      %vm1702 = vcmp.eq.f32.partialorder %v1701, 8.507059e+37
      %v1703 = vand.u32 %v1662, 2147483648
      %v1704 = vor.u32 1.1754944e-38, %v1703
      %v1705 = vsel %vm1702, %v1704, %v1700
      %v1706 = vmul.f32 1.0, %v1705
      %v1707 = vrcp.pop %v1663
      %v1708 = vmul.f32 %v1663, %v1707
      %v1709 = vsub.f32 1.0, %v1708
      %v1710 = vmul.f32 %v1707, %v1709
      %v1711 = vadd.f32 %v1707, %v1710
      %vm1712 = vweird.f32 %v1663
      %vm1713 = vweird.f32 %v1707
      %vm1714 = vmor %vm1712, %vm1713
      %v1715 = vsel %vm1714, %v1707, %v1711
      %v1716 = vand.u32 2147483647, %v1663
      %vm1717 = vcmp.eq.f32.partialorder %v1716, 8.507059e+37
      %v1718 = vand.u32 %v1663, 2147483648
      %v1719 = vor.u32 1.1754944e-38, %v1718
      %v1720 = vsel %vm1717, %v1719, %v1715
      %v1721 = vmul.f32 1.0, %v1720
      %v1722 = vrcp.pop %v1664
      %v1723 = vmul.f32 %v1664, %v1722
      %v1724 = vsub.f32 1.0, %v1723
      %v1725 = vmul.f32 %v1722, %v1724
      %v1726 = vadd.f32 %v1722, %v1725
      %vm1727 = vweird.f32 %v1664
      %vm1728 = vweird.f32 %v1722
      %vm1729 = vmor %vm1727, %vm1728
      %v1730 = vsel %vm1729, %v1722, %v1726
      %v1731 = vand.u32 2147483647, %v1664
      %vm1732 = vcmp.eq.f32.partialorder %v1731, 8.507059e+37
      %v1733 = vand.u32 %v1664, 2147483648
      %v1734 = vor.u32 1.1754944e-38, %v1733
      %v1735 = vsel %vm1732, %v1734, %v1730
      %v1736 = vmul.f32 1.0, %v1735
      %v1737 = vrcp.pop %v1665
      %v1738 = vmul.f32 %v1665, %v1737
      %v1739 = vsub.f32 1.0, %v1738
      %v1740 = vmul.f32 %v1737, %v1739
      %v1741 = vadd.f32 %v1737, %v1740
      %vm1742 = vweird.f32 %v1665
      %vm1743 = vweird.f32 %v1737
      %vm1744 = vmor %vm1742, %vm1743
      %v1745 = vsel %vm1744, %v1737, %v1741
      %v1746 = vand.u32 2147483647, %v1665
      %vm1747 = vcmp.eq.f32.partialorder %v1746, 8.507059e+37
      %v1748 = vand.u32 %v1665, 2147483648
      %v1749 = vor.u32 1.1754944e-38, %v1748
      %v1750 = vsel %vm1747, %v1749, %v1745
      %v1751 = vmul.f32 1.0, %v1750
      %v1752 = vrcp.pop %v1666
      %v1753 = vmul.f32 %v1666, %v1752
      %v1754 = vsub.f32 1.0, %v1753
      %v1755 = vmul.f32 %v1752, %v1754
      %v1756 = vadd.f32 %v1752, %v1755
      %vm1757 = vweird.f32 %v1666
      %vm1758 = vweird.f32 %v1752
      %vm1759 = vmor %vm1757, %vm1758
      %v1760 = vsel %vm1759, %v1752, %v1756
      %v1761 = vand.u32 2147483647, %v1666
      %vm1762 = vcmp.eq.f32.partialorder %v1761, 8.507059e+37
      %v1763 = vand.u32 %v1666, 2147483648
      %v1764 = vor.u32 1.1754944e-38, %v1763
      %v1765 = vsel %vm1762, %v1764, %v1760
      %v1766 = vmul.f32 1.0, %v1765
      %v1767 = vrcp.pop %v1667
      %v1768 = vmul.f32 %v1667, %v1767
      %v1769 = vsub.f32 1.0, %v1768
      %v1770 = vmul.f32 %v1767, %v1769
      %v1771 = vadd.f32 %v1767, %v1770
      %vm1772 = vweird.f32 %v1667
      %vm1773 = vweird.f32 %v1767
      %vm1774 = vmor %vm1772, %vm1773
      %v1775 = vsel %vm1774, %v1767, %v1771
      %v1776 = vand.u32 2147483647, %v1667
      %vm1777 = vcmp.eq.f32.partialorder %v1776, 8.507059e+37
      %v1778 = vand.u32 %v1667, 2147483648
      %v1779 = vor.u32 1.1754944e-38, %v1778
      %v1780 = vsel %vm1777, %v1779, %v1775
      %v1781 = vmul.f32 1.0, %v1780
      %v1782 = vrcp.pop %v1668
      %v1783 = vmul.f32 %v1668, %v1782
      %v1784 = vsub.f32 1.0, %v1783
      %v1785 = vmul.f32 %v1782, %v1784
      %v1786 = vadd.f32 %v1782, %v1785
      %vm1787 = vweird.f32 %v1668
      %vm1788 = vweird.f32 %v1782
      %vm1789 = vmor %vm1787, %vm1788
      %v1790 = vsel %vm1789, %v1782, %v1786
      %v1791 = vand.u32 2147483647, %v1668
      %vm1792 = vcmp.eq.f32.partialorder %v1791, 8.507059e+37
      %v1793 = vand.u32 %v1668, 2147483648
      %v1794 = vor.u32 1.1754944e-38, %v1793
      %v1795 = vsel %vm1792, %v1794, %v1790
      %v1796 = vmul.f32 1.0, %v1795
      %v1797 = vrcp.pop %v1669
      %v1798 = vmul.f32 %v1669, %v1797
      %v1799 = vsub.f32 1.0, %v1798
      %v1800 = vmul.f32 %v1797, %v1799
      %v1801 = vadd.f32 %v1797, %v1800
      %vm1802 = vweird.f32 %v1669
      %vm1803 = vweird.f32 %v1797
      %vm1804 = vmor %vm1802, %vm1803
      %v1805 = vsel %vm1804, %v1797, %v1801
      %v1806 = vand.u32 2147483647, %v1669
      %vm1807 = vcmp.eq.f32.partialorder %v1806, 8.507059e+37
      %v1808 = vand.u32 %v1669, 2147483648
      %v1809 = vor.u32 1.1754944e-38, %v1808
      %v1810 = vsel %vm1807, %v1809, %v1805
      %v1811 = vmul.f32 1.0, %v1810
      %v1812 = vrcp.pop %v1670
      %v1813 = vmul.f32 %v1670, %v1812
      %v1814 = vsub.f32 1.0, %v1813
      %v1815 = vmul.f32 %v1812, %v1814
      %v1816 = vadd.f32 %v1812, %v1815
      %vm1817 = vweird.f32 %v1670
      %vm1818 = vweird.f32 %v1812
      %vm1819 = vmor %vm1817, %vm1818
      %v1820 = vsel %vm1819, %v1812, %v1816
      %v1821 = vand.u32 2147483647, %v1670
      %vm1822 = vcmp.eq.f32.partialorder %v1821, 8.507059e+37
      %v1823 = vand.u32 %v1670, 2147483648
      %v1824 = vor.u32 1.1754944e-38, %v1823
      %v1825 = vsel %vm1822, %v1824, %v1820
      %v1826 = vmul.f32 1.0, %v1825
      %v1827 = vrcp.pop %v1671
      %v1828 = vmul.f32 %v1671, %v1827
      %v1829 = vsub.f32 1.0, %v1828
      %v1830 = vmul.f32 %v1827, %v1829
      %v1831 = vadd.f32 %v1827, %v1830
      %vm1832 = vweird.f32 %v1671
      %vm1833 = vweird.f32 %v1827
      %vm1834 = vmor %vm1832, %vm1833
      %v1835 = vsel %vm1834, %v1827, %v1831
      %v1836 = vand.u32 2147483647, %v1671
      %vm1837 = vcmp.eq.f32.partialorder %v1836, 8.507059e+37
      %v1838 = vand.u32 %v1671, 2147483648
      %v1839 = vor.u32 1.1754944e-38, %v1838
      %v1840 = vsel %vm1837, %v1839, %v1835
      %v1841 = vmul.f32 1.0, %v1840
      %v1842 = vrcp.pop %v1672
      %v1843 = vmul.f32 %v1672, %v1842
      %v1844 = vsub.f32 1.0, %v1843
      %v1845 = vmul.f32 %v1842, %v1844
      %v1846 = vadd.f32 %v1842, %v1845
      %vm1847 = vweird.f32 %v1672
      %vm1848 = vweird.f32 %v1842
      %vm1849 = vmor %vm1847, %vm1848
      %v1850 = vsel %vm1849, %v1842, %v1846
      %v1851 = vand.u32 2147483647, %v1672
      %vm1852 = vcmp.eq.f32.partialorder %v1851, 8.507059e+37
      %v1853 = vand.u32 %v1672, 2147483648
      %v1854 = vor.u32 1.1754944e-38, %v1853
      %v1855 = vsel %vm1852, %v1854, %v1850
      %v1856 = vmul.f32 1.0, %v1855
      %v1857 = vrcp.pop %v1673
      %v1858 = vmul.f32 %v1673, %v1857
      %v1859 = vsub.f32 1.0, %v1858
      %v1860 = vmul.f32 %v1857, %v1859
      %v1861 = vadd.f32 %v1857, %v1860
      %vm1862 = vweird.f32 %v1673
      %vm1863 = vweird.f32 %v1857
      %vm1864 = vmor %vm1862, %vm1863
      %v1865 = vsel %vm1864, %v1857, %v1861
      %v1866 = vand.u32 2147483647, %v1673
      %vm1867 = vcmp.eq.f32.partialorder %v1866, 8.507059e+37
      %v1868 = vand.u32 %v1673, 2147483648
      %v1869 = vor.u32 1.1754944e-38, %v1868
      %v1870 = vsel %vm1867, %v1869, %v1865
      %v1871 = vmul.f32 1.0, %v1870
      %v1872 = vrcp.pop %v1674
      %v1873 = vmul.f32 %v1674, %v1872
      %v1874 = vsub.f32 1.0, %v1873
      %v1875 = vmul.f32 %v1872, %v1874
      %v1876 = vadd.f32 %v1872, %v1875
      %vm1877 = vweird.f32 %v1674
      %vm1878 = vweird.f32 %v1872
      %vm1879 = vmor %vm1877, %vm1878
      %v1880 = vsel %vm1879, %v1872, %v1876
      %v1881 = vand.u32 2147483647, %v1674
      %vm1882 = vcmp.eq.f32.partialorder %v1881, 8.507059e+37
      %v1883 = vand.u32 %v1674, 2147483648
      %v1884 = vor.u32 1.1754944e-38, %v1883
      %v1885 = vsel %vm1882, %v1884, %v1880
      %v1886 = vmul.f32 1.0, %v1885
      %v1887 = vrcp.pop %v1675
      %v1888 = vmul.f32 %v1675, %v1887
      %v1889 = vsub.f32 1.0, %v1888
      %v1890 = vmul.f32 %v1887, %v1889
      %v1891 = vadd.f32 %v1887, %v1890
      %vm1892 = vweird.f32 %v1675
      %vm1893 = vweird.f32 %v1887
      %vm1894 = vmor %vm1892, %vm1893
      %v1895 = vsel %vm1894, %v1887, %v1891
      %v1896 = vand.u32 2147483647, %v1675
      %vm1897 = vcmp.eq.f32.partialorder %v1896, 8.507059e+37
      %v1898 = vand.u32 %v1675, 2147483648
      %v1899 = vor.u32 1.1754944e-38, %v1898
      %v1900 = vsel %vm1897, %v1899, %v1895
      %v1901 = vmul.f32 1.0, %v1900
      %v1902 = vrcp.pop %v1676
      %v1903 = vmul.f32 %v1676, %v1902
      %v1904 = vsub.f32 1.0, %v1903
      %v1905 = vmul.f32 %v1902, %v1904
      %v1906 = vadd.f32 %v1902, %v1905
      %vm1907 = vweird.f32 %v1676
      %vm1908 = vweird.f32 %v1902
      %vm1909 = vmor %vm1907, %vm1908
      %v1910 = vsel %vm1909, %v1902, %v1906
      %v1911 = vand.u32 2147483647, %v1676
      %vm1912 = vcmp.eq.f32.partialorder %v1911, 8.507059e+37
      %v1913 = vand.u32 %v1676, 2147483648
      %v1914 = vor.u32 1.1754944e-38, %v1913
      %v1915 = vsel %vm1912, %v1914, %v1910
      %v1916 = vmul.f32 1.0, %v1915
      %1917 = vmatpush.msra.mxu0 %v1431
      %1918 = vmatpush.msra.mxu0 %v1430
      %1919 = vmatpush.msra.mxu0 %v1429
      %1920 = vmatpush.msra.mxu0 %v1428
      %1921 = vmatpush.msra.mxu0 %v1427
      %1922 = vmatpush.msra.mxu0 %v1426
      %1923 = vmatpush.msra.mxu0 %v1425
      %1924 = vmatpush.msra.mxu0 %v1424
      %1925 = vmatpush.msra.mxu0 %v1423
      %1926 = vmatpush.msra.mxu0 %v1422
      %1927 = vmatpush.msra.mxu0 %v1421
      %1928 = vmatpush.msra.mxu0 %v1420
      %1929 = vmatpush.msra.mxu0 %v1419
      %1930 = vmatpush.msra.mxu0 %v1418
      %1931 = vmatpush.msra.mxu0 %v1417
      %1932 = vmatpush.msra.mxu0 %v1416
      %1933 = vmatmul.f32.gmra.mxu0 %v326
      %v1934 = vpop.f32.mrf.mxu0
      %v1935 = vadd.f32 %v1434, %v1934
      %1936 = vmatmul.f32.gmra.mxu0 %v327
      %v1937 = vpop.f32.mrf.mxu0
      %v1938 = vadd.f32 %v1438, %v1937
      %1939 = vmatmul.f32.gmra.mxu0 %v328
      %v1940 = vpop.f32.mrf.mxu0
      %v1941 = vadd.f32 %v1442, %v1940
      %1942 = vmatmul.f32.gmra.mxu0 %v329
      %v1943 = vpop.f32.mrf.mxu0
      %v1944 = vadd.f32 %v1446, %v1943
      %1945 = vmatmul.f32.gmra.mxu0 %v330
      %v1946 = vpop.f32.mrf.mxu0
      %v1947 = vadd.f32 %v1450, %v1946
      %1948 = vmatmul.f32.gmra.mxu0 %v331
      %v1949 = vpop.f32.mrf.mxu0
      %v1950 = vadd.f32 %v1454, %v1949
      %1951 = vmatmul.f32.gmra.mxu0 %v332
      %v1952 = vpop.f32.mrf.mxu0
      %v1953 = vadd.f32 %v1458, %v1952
      %1954 = vmatmul.f32.gmra.mxu0 %v333
      %v1955 = vpop.f32.mrf.mxu0
      %v1956 = vadd.f32 %v1462, %v1955
      %1957 = vmatmul.f32.gmra.mxu0 %v334
      %v1958 = vpop.f32.mrf.mxu0
      %v1959 = vadd.f32 %v1466, %v1958
      %1960 = vmatmul.f32.gmra.mxu0 %v335
      %v1961 = vpop.f32.mrf.mxu0
      %v1962 = vadd.f32 %v1470, %v1961
      %1963 = vmatmul.f32.gmra.mxu0 %v336
      %v1964 = vpop.f32.mrf.mxu0
      %v1965 = vadd.f32 %v1474, %v1964
      %1966 = vmatmul.f32.gmra.mxu0 %v337
      %v1967 = vpop.f32.mrf.mxu0
      %v1968 = vadd.f32 %v1478, %v1967
      %1969 = vmatmul.f32.gmra.mxu0 %v338
      %v1970 = vpop.f32.mrf.mxu0
      %v1971 = vadd.f32 %v1482, %v1970
      %1972 = vmatmul.f32.gmra.mxu0 %v339
      %v1973 = vpop.f32.mrf.mxu0
      %v1974 = vadd.f32 %v1486, %v1973
      %1975 = vmatmul.f32.gmra.mxu0 %v340
      %v1976 = vpop.f32.mrf.mxu0
      %v1977 = vadd.f32 %v1490, %v1976
      %1978 = vmatmul.f32.gmra.mxu0 %v341
      %v1979 = vpop.f32.mrf.mxu0
      %v1980 = vadd.f32 %v1494, %v1979
      %1981 = vdwg.mxu0
      %v1982 = vadd.f32 %v1935, %v1595
      %v1983 = vadd.f32 %v1938, %v1595
      %v1984 = vadd.f32 %v1941, %v1595
      %v1985 = vadd.f32 %v1944, %v1595
      %v1986 = vadd.f32 %v1947, %v1595
      %v1987 = vadd.f32 %v1950, %v1595
      %v1988 = vadd.f32 %v1953, %v1595
      %v1989 = vadd.f32 %v1956, %v1595
      %v1990 = vadd.f32 %v1959, %v1595
      %v1991 = vadd.f32 %v1962, %v1595
      %v1992 = vadd.f32 %v1965, %v1595
      %v1993 = vadd.f32 %v1968, %v1595
      %v1994 = vadd.f32 %v1971, %v1595
      %v1995 = vadd.f32 %v1974, %v1595
      %v1996 = vadd.f32 %v1977, %v1595
      %v1997 = vadd.f32 %v1980, %v1595
      %v1998 = vxor.u32 %v1982, 2147483648
      %v1999 = vxor.u32 %v1983, 2147483648
      %v2000 = vxor.u32 %v1984, 2147483648
      %v2001 = vxor.u32 %v1985, 2147483648
      %v2002 = vxor.u32 %v1986, 2147483648
      %v2003 = vxor.u32 %v1987, 2147483648
      %v2004 = vxor.u32 %v1988, 2147483648
      %v2005 = vxor.u32 %v1989, 2147483648
      %v2006 = vxor.u32 %v1990, 2147483648
      %v2007 = vxor.u32 %v1991, 2147483648
      %v2008 = vxor.u32 %v1992, 2147483648
      %v2009 = vxor.u32 %v1993, 2147483648
      %v2010 = vxor.u32 %v1994, 2147483648
      %v2011 = vxor.u32 %v1995, 2147483648
      %v2012 = vxor.u32 %v1996, 2147483648
      %v2013 = vxor.u32 %v1997, 2147483648
      %v2014 = vmul.f32 %v1998, 1.442695
      %v2015 = vpow.pop %v2014
      %v2016 = vmul.f32 %v1999, 1.442695
      %v2017 = vpow.pop %v2016
      %v2018 = vmul.f32 %v2000, 1.442695
      %v2019 = vpow.pop %v2018
      %v2020 = vmul.f32 %v2001, 1.442695
      %v2021 = vpow.pop %v2020
      %v2022 = vmul.f32 %v2002, 1.442695
      %v2023 = vpow.pop %v2022
      %v2024 = vmul.f32 %v2003, 1.442695
      %v2025 = vpow.pop %v2024
      %v2026 = vmul.f32 %v2004, 1.442695
      %v2027 = vpow.pop %v2026
      %v2028 = vmul.f32 %v2005, 1.442695
      %v2029 = vpow.pop %v2028
      %v2030 = vmul.f32 %v2006, 1.442695
      %v2031 = vpow.pop %v2030
      %v2032 = vmul.f32 %v2007, 1.442695
      %v2033 = vpow.pop %v2032
      %v2034 = vmul.f32 %v2008, 1.442695
      %v2035 = vpow.pop %v2034
      %v2036 = vmul.f32 %v2009, 1.442695
      %v2037 = vpow.pop %v2036
      %v2038 = vmul.f32 %v2010, 1.442695
      %v2039 = vpow.pop %v2038
      %v2040 = vmul.f32 %v2011, 1.442695
      %v2041 = vpow.pop %v2040
      %v2042 = vmul.f32 %v2012, 1.442695
      %v2043 = vpow.pop %v2042
      %v2044 = vmul.f32 %v2013, 1.442695
      %v2045 = vpow.pop %v2044
      %v2046 = vadd.f32 %v2015, 1.0
      %v2047 = vadd.f32 %v2017, 1.0
      %v2048 = vadd.f32 %v2019, 1.0
      %v2049 = vadd.f32 %v2021, 1.0
      %v2050 = vadd.f32 %v2023, 1.0
      %v2051 = vadd.f32 %v2025, 1.0
      %v2052 = vadd.f32 %v2027, 1.0
      %v2053 = vadd.f32 %v2029, 1.0
      %v2054 = vadd.f32 %v2031, 1.0
      %v2055 = vadd.f32 %v2033, 1.0
      %v2056 = vadd.f32 %v2035, 1.0
      %v2057 = vadd.f32 %v2037, 1.0
      %v2058 = vadd.f32 %v2039, 1.0
      %v2059 = vadd.f32 %v2041, 1.0
      %v2060 = vadd.f32 %v2043, 1.0
      %v2061 = vadd.f32 %v2045, 1.0
      %v2062 = vrcp.pop %v2046
      %v2063 = vmul.f32 %v2046, %v2062
      %v2064 = vsub.f32 1.0, %v2063
      %v2065 = vmul.f32 %v2062, %v2064
      %v2066 = vadd.f32 %v2062, %v2065
      %vm2067 = vweird.f32 %v2046
      %vm2068 = vweird.f32 %v2062
      %vm2069 = vmor %vm2067, %vm2068
      %v2070 = vsel %vm2069, %v2062, %v2066
      %v2071 = vand.u32 2147483647, %v2046
      %vm2072 = vcmp.eq.f32.partialorder %v2071, 8.507059e+37
      %v2073 = vand.u32 %v2046, 2147483648
      %v2074 = vor.u32 1.1754944e-38, %v2073
      %v2075 = vsel %vm2072, %v2074, %v2070
      %v2076 = vmul.f32 1.0, %v2075
      %v2077 = vrcp.pop %v2047
      %v2078 = vmul.f32 %v2047, %v2077
      %v2079 = vsub.f32 1.0, %v2078
      %v2080 = vmul.f32 %v2077, %v2079
      %v2081 = vadd.f32 %v2077, %v2080
      %vm2082 = vweird.f32 %v2047
      %vm2083 = vweird.f32 %v2077
      %vm2084 = vmor %vm2082, %vm2083
      %v2085 = vsel %vm2084, %v2077, %v2081
      %v2086 = vand.u32 2147483647, %v2047
      %vm2087 = vcmp.eq.f32.partialorder %v2086, 8.507059e+37
      %v2088 = vand.u32 %v2047, 2147483648
      %v2089 = vor.u32 1.1754944e-38, %v2088
      %v2090 = vsel %vm2087, %v2089, %v2085
      %v2091 = vmul.f32 1.0, %v2090
      %v2092 = vrcp.pop %v2048
      %v2093 = vmul.f32 %v2048, %v2092
      %v2094 = vsub.f32 1.0, %v2093
      %v2095 = vmul.f32 %v2092, %v2094
      %v2096 = vadd.f32 %v2092, %v2095
      %vm2097 = vweird.f32 %v2048
      %vm2098 = vweird.f32 %v2092
      %vm2099 = vmor %vm2097, %vm2098
      %v2100 = vsel %vm2099, %v2092, %v2096
      %v2101 = vand.u32 2147483647, %v2048
      %vm2102 = vcmp.eq.f32.partialorder %v2101, 8.507059e+37
      %v2103 = vand.u32 %v2048, 2147483648
      %v2104 = vor.u32 1.1754944e-38, %v2103
      %v2105 = vsel %vm2102, %v2104, %v2100
      %v2106 = vmul.f32 1.0, %v2105
      %v2107 = vrcp.pop %v2049
      %v2108 = vmul.f32 %v2049, %v2107
      %v2109 = vsub.f32 1.0, %v2108
      %v2110 = vmul.f32 %v2107, %v2109
      %v2111 = vadd.f32 %v2107, %v2110
      %vm2112 = vweird.f32 %v2049
      %vm2113 = vweird.f32 %v2107
      %vm2114 = vmor %vm2112, %vm2113
      %v2115 = vsel %vm2114, %v2107, %v2111
      %v2116 = vand.u32 2147483647, %v2049
      %vm2117 = vcmp.eq.f32.partialorder %v2116, 8.507059e+37
      %v2118 = vand.u32 %v2049, 2147483648
      %v2119 = vor.u32 1.1754944e-38, %v2118
      %v2120 = vsel %vm2117, %v2119, %v2115
      %v2121 = vmul.f32 1.0, %v2120
      %v2122 = vrcp.pop %v2050
      %v2123 = vmul.f32 %v2050, %v2122
      %v2124 = vsub.f32 1.0, %v2123
      %v2125 = vmul.f32 %v2122, %v2124
      %v2126 = vadd.f32 %v2122, %v2125
      %vm2127 = vweird.f32 %v2050
      %vm2128 = vweird.f32 %v2122
      %vm2129 = vmor %vm2127, %vm2128
      %v2130 = vsel %vm2129, %v2122, %v2126
      %v2131 = vand.u32 2147483647, %v2050
      %vm2132 = vcmp.eq.f32.partialorder %v2131, 8.507059e+37
      %v2133 = vand.u32 %v2050, 2147483648
      %v2134 = vor.u32 1.1754944e-38, %v2133
      %v2135 = vsel %vm2132, %v2134, %v2130
      %v2136 = vmul.f32 1.0, %v2135
      %v2137 = vrcp.pop %v2051
      %v2138 = vmul.f32 %v2051, %v2137
      %v2139 = vsub.f32 1.0, %v2138
      %v2140 = vmul.f32 %v2137, %v2139
      %v2141 = vadd.f32 %v2137, %v2140
      %vm2142 = vweird.f32 %v2051
      %vm2143 = vweird.f32 %v2137
      %vm2144 = vmor %vm2142, %vm2143
      %v2145 = vsel %vm2144, %v2137, %v2141
      %v2146 = vand.u32 2147483647, %v2051
      %vm2147 = vcmp.eq.f32.partialorder %v2146, 8.507059e+37
      %v2148 = vand.u32 %v2051, 2147483648
      %v2149 = vor.u32 1.1754944e-38, %v2148
      %v2150 = vsel %vm2147, %v2149, %v2145
      %v2151 = vmul.f32 1.0, %v2150
      %v2152 = vrcp.pop %v2052
      %v2153 = vmul.f32 %v2052, %v2152
      %v2154 = vsub.f32 1.0, %v2153
      %v2155 = vmul.f32 %v2152, %v2154
      %v2156 = vadd.f32 %v2152, %v2155
      %vm2157 = vweird.f32 %v2052
      %vm2158 = vweird.f32 %v2152
      %vm2159 = vmor %vm2157, %vm2158
      %v2160 = vsel %vm2159, %v2152, %v2156
      %v2161 = vand.u32 2147483647, %v2052
      %vm2162 = vcmp.eq.f32.partialorder %v2161, 8.507059e+37
      %v2163 = vand.u32 %v2052, 2147483648
      %v2164 = vor.u32 1.1754944e-38, %v2163
      %v2165 = vsel %vm2162, %v2164, %v2160
      %v2166 = vmul.f32 1.0, %v2165
      %v2167 = vrcp.pop %v2053
      %v2168 = vmul.f32 %v2053, %v2167
      %v2169 = vsub.f32 1.0, %v2168
      %v2170 = vmul.f32 %v2167, %v2169
      %v2171 = vadd.f32 %v2167, %v2170
      %vm2172 = vweird.f32 %v2053
      %vm2173 = vweird.f32 %v2167
      %vm2174 = vmor %vm2172, %vm2173
      %v2175 = vsel %vm2174, %v2167, %v2171
      %v2176 = vand.u32 2147483647, %v2053
      %vm2177 = vcmp.eq.f32.partialorder %v2176, 8.507059e+37
      %v2178 = vand.u32 %v2053, 2147483648
      %v2179 = vor.u32 1.1754944e-38, %v2178
      %v2180 = vsel %vm2177, %v2179, %v2175
      %v2181 = vmul.f32 1.0, %v2180
      %v2182 = vrcp.pop %v2054
      %v2183 = vmul.f32 %v2054, %v2182
      %v2184 = vsub.f32 1.0, %v2183
      %v2185 = vmul.f32 %v2182, %v2184
      %v2186 = vadd.f32 %v2182, %v2185
      %vm2187 = vweird.f32 %v2054
      %vm2188 = vweird.f32 %v2182
      %vm2189 = vmor %vm2187, %vm2188
      %v2190 = vsel %vm2189, %v2182, %v2186
      %v2191 = vand.u32 2147483647, %v2054
      %vm2192 = vcmp.eq.f32.partialorder %v2191, 8.507059e+37
      %v2193 = vand.u32 %v2054, 2147483648
      %v2194 = vor.u32 1.1754944e-38, %v2193
      %v2195 = vsel %vm2192, %v2194, %v2190
      %v2196 = vmul.f32 1.0, %v2195
      %v2197 = vrcp.pop %v2055
      %v2198 = vmul.f32 %v2055, %v2197
      %v2199 = vsub.f32 1.0, %v2198
      %v2200 = vmul.f32 %v2197, %v2199
      %v2201 = vadd.f32 %v2197, %v2200
      %vm2202 = vweird.f32 %v2055
      %vm2203 = vweird.f32 %v2197
      %vm2204 = vmor %vm2202, %vm2203
      %v2205 = vsel %vm2204, %v2197, %v2201
      %v2206 = vand.u32 2147483647, %v2055
      %vm2207 = vcmp.eq.f32.partialorder %v2206, 8.507059e+37
      %v2208 = vand.u32 %v2055, 2147483648
      %v2209 = vor.u32 1.1754944e-38, %v2208
      %v2210 = vsel %vm2207, %v2209, %v2205
      %v2211 = vmul.f32 1.0, %v2210
      %v2212 = vrcp.pop %v2056
      %v2213 = vmul.f32 %v2056, %v2212
      %v2214 = vsub.f32 1.0, %v2213
      %v2215 = vmul.f32 %v2212, %v2214
      %v2216 = vadd.f32 %v2212, %v2215
      %vm2217 = vweird.f32 %v2056
      %vm2218 = vweird.f32 %v2212
      %vm2219 = vmor %vm2217, %vm2218
      %v2220 = vsel %vm2219, %v2212, %v2216
      %v2221 = vand.u32 2147483647, %v2056
      %vm2222 = vcmp.eq.f32.partialorder %v2221, 8.507059e+37
      %v2223 = vand.u32 %v2056, 2147483648
      %v2224 = vor.u32 1.1754944e-38, %v2223
      %v2225 = vsel %vm2222, %v2224, %v2220
      %v2226 = vmul.f32 1.0, %v2225
      %v2227 = vrcp.pop %v2057
      %v2228 = vmul.f32 %v2057, %v2227
      %v2229 = vsub.f32 1.0, %v2228
      %v2230 = vmul.f32 %v2227, %v2229
      %v2231 = vadd.f32 %v2227, %v2230
      %vm2232 = vweird.f32 %v2057
      %vm2233 = vweird.f32 %v2227
      %vm2234 = vmor %vm2232, %vm2233
      %v2235 = vsel %vm2234, %v2227, %v2231
      %v2236 = vand.u32 2147483647, %v2057
      %vm2237 = vcmp.eq.f32.partialorder %v2236, 8.507059e+37
      %v2238 = vand.u32 %v2057, 2147483648
      %v2239 = vor.u32 1.1754944e-38, %v2238
      %v2240 = vsel %vm2237, %v2239, %v2235
      %v2241 = vmul.f32 1.0, %v2240
      %v2242 = vrcp.pop %v2058
      %v2243 = vmul.f32 %v2058, %v2242
      %v2244 = vsub.f32 1.0, %v2243
      %v2245 = vmul.f32 %v2242, %v2244
      %v2246 = vadd.f32 %v2242, %v2245
      %vm2247 = vweird.f32 %v2058
      %vm2248 = vweird.f32 %v2242
      %vm2249 = vmor %vm2247, %vm2248
      %v2250 = vsel %vm2249, %v2242, %v2246
      %v2251 = vand.u32 2147483647, %v2058
      %vm2252 = vcmp.eq.f32.partialorder %v2251, 8.507059e+37
      %v2253 = vand.u32 %v2058, 2147483648
      %v2254 = vor.u32 1.1754944e-38, %v2253
      %v2255 = vsel %vm2252, %v2254, %v2250
      %v2256 = vmul.f32 1.0, %v2255
      %v2257 = vrcp.pop %v2059
      %v2258 = vmul.f32 %v2059, %v2257
      %v2259 = vsub.f32 1.0, %v2258
      %v2260 = vmul.f32 %v2257, %v2259
      %v2261 = vadd.f32 %v2257, %v2260
      %vm2262 = vweird.f32 %v2059
      %vm2263 = vweird.f32 %v2257
      %vm2264 = vmor %vm2262, %vm2263
      %v2265 = vsel %vm2264, %v2257, %v2261
      %v2266 = vand.u32 2147483647, %v2059
      %vm2267 = vcmp.eq.f32.partialorder %v2266, 8.507059e+37
      %v2268 = vand.u32 %v2059, 2147483648
      %v2269 = vor.u32 1.1754944e-38, %v2268
      %v2270 = vsel %vm2267, %v2269, %v2265
      %v2271 = vmul.f32 1.0, %v2270
      %v2272 = vrcp.pop %v2060
      %v2273 = vmul.f32 %v2060, %v2272
      %v2274 = vsub.f32 1.0, %v2273
      %v2275 = vmul.f32 %v2272, %v2274
      %v2276 = vadd.f32 %v2272, %v2275
      %vm2277 = vweird.f32 %v2060
      %vm2278 = vweird.f32 %v2272
      %vm2279 = vmor %vm2277, %vm2278
      %v2280 = vsel %vm2279, %v2272, %v2276
      %v2281 = vand.u32 2147483647, %v2060
      %vm2282 = vcmp.eq.f32.partialorder %v2281, 8.507059e+37
      %v2283 = vand.u32 %v2060, 2147483648
      %v2284 = vor.u32 1.1754944e-38, %v2283
      %v2285 = vsel %vm2282, %v2284, %v2280
      %v2286 = vmul.f32 1.0, %v2285
      %v2287 = vrcp.pop %v2061
      %v2288 = vmul.f32 %v2061, %v2287
      %v2289 = vsub.f32 1.0, %v2288
      %v2290 = vmul.f32 %v2287, %v2289
      %v2291 = vadd.f32 %v2287, %v2290
      %vm2292 = vweird.f32 %v2061
      %vm2293 = vweird.f32 %v2287
      %vm2294 = vmor %vm2292, %vm2293
      %v2295 = vsel %vm2294, %v2287, %v2291
      %v2296 = vand.u32 2147483647, %v2061
      %vm2297 = vcmp.eq.f32.partialorder %v2296, 8.507059e+37
      %v2298 = vand.u32 %v2061, 2147483648
      %v2299 = vor.u32 1.1754944e-38, %v2298
      %v2300 = vsel %vm2297, %v2299, %v2295
      %v2301 = vmul.f32 1.0, %v2300
      %v2302 = vsub.f32 1.0, %v2076
      %v2303 = vsub.f32 1.0, %v2091
      %v2304 = vsub.f32 1.0, %v2106
      %v2305 = vsub.f32 1.0, %v2121
      %v2306 = vsub.f32 1.0, %v2136
      %v2307 = vsub.f32 1.0, %v2151
      %v2308 = vsub.f32 1.0, %v2166
      %v2309 = vsub.f32 1.0, %v2181
      %v2310 = vsub.f32 1.0, %v2196
      %v2311 = vsub.f32 1.0, %v2211
      %v2312 = vsub.f32 1.0, %v2226
      %v2313 = vsub.f32 1.0, %v2241
      %v2314 = vsub.f32 1.0, %v2256
      %v2315 = vsub.f32 1.0, %v2271
      %v2316 = vsub.f32 1.0, %v2286
      %v2317 = vsub.f32 1.0, %v2301
      %2318 = vmatpush.msra.mxu0 %v229
      %2319 = vmatpush.msra.mxu0 %v228
      %2320 = vmatpush.msra.mxu0 %v227
      %2321 = vmatpush.msra.mxu0 %v226
      %2322 = vmatpush.msra.mxu0 %v225
      %2323 = vmatpush.msra.mxu0 %v224
      %2324 = vmatpush.msra.mxu0 %v223
      %2325 = vmatpush.msra.mxu0 %v222
      %2326 = vmatpush.msra.mxu0 %v221
      %2327 = vmatpush.msra.mxu0 %v220
      %2328 = vmatpush.msra.mxu0 %v219
      %2329 = vmatpush.msra.mxu0 %v218
      %2330 = vmatpush.msra.mxu0 %v217
      %2331 = vmatpush.msra.mxu0 %v216
      %2332 = vmatpush.msra.mxu0 %v215
      %2333 = vmatpush.msra.mxu0 %v214
      %2334 = vmatmul.f32.gmra.mxu0 %v520
      %v2335 = vpop.f32.mrf.mxu0
      %v2336 = vadd.f32 0.0, %v2335
      %2337 = vmatmul.f32.gmra.mxu0 %v521
      %v2338 = vpop.f32.mrf.mxu0
      %v2339 = vadd.f32 0.0, %v2338
      %2340 = vmatmul.f32.gmra.mxu0 %v522
      %v2341 = vpop.f32.mrf.mxu0
      %v2342 = vadd.f32 0.0, %v2341
      %2343 = vmatmul.f32.gmra.mxu0 %v523
      %v2344 = vpop.f32.mrf.mxu0
      %v2345 = vadd.f32 0.0, %v2344
      %2346 = vmatmul.f32.gmra.mxu0 %v524
      %v2347 = vpop.f32.mrf.mxu0
      %v2348 = vadd.f32 0.0, %v2347
      %2349 = vmatmul.f32.gmra.mxu0 %v525
      %v2350 = vpop.f32.mrf.mxu0
      %v2351 = vadd.f32 0.0, %v2350
      %2352 = vmatmul.f32.gmra.mxu0 %v526
      %v2353 = vpop.f32.mrf.mxu0
      %v2354 = vadd.f32 0.0, %v2353
      %2355 = vmatmul.f32.gmra.mxu0 %v527
      %v2356 = vpop.f32.mrf.mxu0
      %v2357 = vadd.f32 0.0, %v2356
      %2358 = vmatmul.f32.gmra.mxu0 %v528
      %v2359 = vpop.f32.mrf.mxu0
      %v2360 = vadd.f32 0.0, %v2359
      %2361 = vmatmul.f32.gmra.mxu0 %v529
      %v2362 = vpop.f32.mrf.mxu0
      %v2363 = vadd.f32 0.0, %v2362
      %2364 = vmatmul.f32.gmra.mxu0 %v530
      %v2365 = vpop.f32.mrf.mxu0
      %v2366 = vadd.f32 0.0, %v2365
      %2367 = vmatmul.f32.gmra.mxu0 %v531
      %v2368 = vpop.f32.mrf.mxu0
      %v2369 = vadd.f32 0.0, %v2368
      %2370 = vmatmul.f32.gmra.mxu0 %v532
      %v2371 = vpop.f32.mrf.mxu0
      %v2372 = vadd.f32 0.0, %v2371
      %2373 = vmatmul.f32.gmra.mxu0 %v533
      %v2374 = vpop.f32.mrf.mxu0
      %v2375 = vadd.f32 0.0, %v2374
      %2376 = vmatmul.f32.gmra.mxu0 %v534
      %v2377 = vpop.f32.mrf.mxu0
      %v2378 = vadd.f32 0.0, %v2377
      %2379 = vmatmul.f32.gmra.mxu0 %v535
      %v2380 = vpop.f32.mrf.mxu0
      %v2381 = vadd.f32 0.0, %v2380
      %2382 = vdwg.mxu0
      %vm2383 = vcmp.eq.f32.partialorder %v147, 1.0
      %vm2384 = vcmp.eq.f32.partialorder %v148, 1.0
      %vm2385 = vcmp.eq.f32.partialorder %v149, 1.0
      %vm2386 = vcmp.eq.f32.partialorder %v150, 1.0
      %vm2387 = vcmp.eq.f32.partialorder %v151, 1.0
      %vm2388 = vcmp.eq.f32.partialorder %v152, 1.0
      %vm2389 = vcmp.eq.f32.partialorder %v153, 1.0
      %vm2390 = vcmp.eq.f32.partialorder %v154, 1.0
      %vm2391 = vcmp.eq.f32.partialorder %v155, 1.0
      %vm2392 = vcmp.eq.f32.partialorder %v156, 1.0
      %vm2393 = vcmp.eq.f32.partialorder %v157, 1.0
      %vm2394 = vcmp.eq.f32.partialorder %v158, 1.0
      %vm2395 = vcmp.eq.f32.partialorder %v159, 1.0
      %vm2396 = vcmp.eq.f32.partialorder %v160, 1.0
      %vm2397 = vcmp.eq.f32.partialorder %v161, 1.0
      %vm2398 = vcmp.eq.f32.partialorder %v162, 1.0
      %vm2399 = vcmp.eq.f32.partialorder %v2336, 1.0
      %vm2400 = vcmp.eq.f32.partialorder %v2339, 1.0
      %vm2401 = vcmp.eq.f32.partialorder %v2342, 1.0
      %vm2402 = vcmp.eq.f32.partialorder %v2345, 1.0
      %vm2403 = vcmp.eq.f32.partialorder %v2348, 1.0
      %vm2404 = vcmp.eq.f32.partialorder %v2351, 1.0
      %vm2405 = vcmp.eq.f32.partialorder %v2354, 1.0
      %vm2406 = vcmp.eq.f32.partialorder %v2357, 1.0
      %vm2407 = vcmp.eq.f32.partialorder %v2360, 1.0
      %vm2408 = vcmp.eq.f32.partialorder %v2363, 1.0
      %vm2409 = vcmp.eq.f32.partialorder %v2366, 1.0
      %vm2410 = vcmp.eq.f32.partialorder %v2369, 1.0
      %vm2411 = vcmp.eq.f32.partialorder %v2372, 1.0
      %vm2412 = vcmp.eq.f32.partialorder %v2375, 1.0
      %vm2413 = vcmp.eq.f32.partialorder %v2378, 1.0
      %vm2414 = vcmp.eq.f32.partialorder %v2381, 1.0
      %vm2415 = vmand %vm2383, %vm2399
      %vm2416 = vmand %vm2384, %vm2400
      %vm2417 = vmand %vm2385, %vm2401
      %vm2418 = vmand %vm2386, %vm2402
      %vm2419 = vmand %vm2387, %vm2403
      %vm2420 = vmand %vm2388, %vm2404
      %vm2421 = vmand %vm2389, %vm2405
      %vm2422 = vmand %vm2390, %vm2406
      %vm2423 = vmand %vm2391, %vm2407
      %vm2424 = vmand %vm2392, %vm2408
      %vm2425 = vmand %vm2393, %vm2409
      %vm2426 = vmand %vm2394, %vm2410
      %vm2427 = vmand %vm2395, %vm2411
      %vm2428 = vmand %vm2396, %vm2412
      %vm2429 = vmand %vm2397, %vm2413
      %vm2430 = vmand %vm2398, %vm2414
      %v2431 = vsel %vm230, %v2302, %v1691
      %v2432 = vsel %vm231, %v2303, %v1706
      %v2433 = vsel %vm232, %v2304, %v1721
      %v2434 = vsel %vm233, %v2305, %v1736
      %v2435 = vsel %vm234, %v2306, %v1751
      %v2436 = vsel %vm235, %v2307, %v1766
      %v2437 = vsel %vm236, %v2308, %v1781
      %v2438 = vsel %vm237, %v2309, %v1796
      %v2439 = vsel %vm238, %v2310, %v1811
      %v2440 = vsel %vm239, %v2311, %v1826
      %v2441 = vsel %vm240, %v2312, %v1841
      %v2442 = vsel %vm241, %v2313, %v1856
      %v2443 = vsel %vm242, %v2314, %v1871
      %v2444 = vsel %vm243, %v2315, %v1886
      %v2445 = vsel %vm244, %v2316, %v1901
      %v2446 = vsel %vm245, %v2317, %v1916
      %v2447 = vsel %vm2415, %v2431, %v147
      %v2448 = vsel %vm2416, %v2432, %v148
      %v2449 = vsel %vm2417, %v2433, %v149
      %v2450 = vsel %vm2418, %v2434, %v150
      %v2451 = vsel %vm2419, %v2435, %v151
      %v2452 = vsel %vm2420, %v2436, %v152
      %v2453 = vsel %vm2421, %v2437, %v153
      %v2454 = vsel %vm2422, %v2438, %v154
      %v2455 = vsel %vm2423, %v2439, %v155
      %v2456 = vsel %vm2424, %v2440, %v156
      %v2457 = vsel %vm2425, %v2441, %v157
      %v2458 = vsel %vm2426, %v2442, %v158
      %v2459 = vsel %vm2427, %v2443, %v159
      %v2460 = vsel %vm2428, %v2444, %v160
      %v2461 = vsel %vm2429, %v2445, %v161
      %v2462 = vsel %vm2430, %v2446, %v162
      %2463 = vst.msk [vmem:[%s145] sm:$0xff] %vm358, %v2447
      %2464 = vst.msk [vmem:[%s145 + $0x8] sm:$0xff] %vm358, %v2448
      %2465 = vst.msk [vmem:[%s145 + $0x10] sm:$0xff] %vm358, %v2449
      %2466 = vst.msk [vmem:[%s145 + $0x18] sm:$0xff] %vm358, %v2450
      %2467 = vst.msk [vmem:[%s145 + $0x20] sm:$0xff] %vm358, %v2451
      %2468 = vst.msk [vmem:[%s145 + $0x28] sm:$0xff] %vm358, %v2452
      %2469 = vst.msk [vmem:[%s145 + $0x30] sm:$0xff] %vm358, %v2453
      %2470 = vst.msk [vmem:[%s145 + $0x38] sm:$0xff] %vm358, %v2454
      %2471 = vst.msk [vmem:[%s145 + $0x40] sm:$0xff] %vm358, %v2455
      %2472 = vst.msk [vmem:[%s145 + $0x48] sm:$0xff] %vm358, %v2456
      %2473 = vst.msk [vmem:[%s145 + $0x50] sm:$0xff] %vm358, %v2457
      %2474 = vst.msk [vmem:[%s145 + $0x58] sm:$0xff] %vm358, %v2458
      %2475 = vst.msk [vmem:[%s145 + $0x60] sm:$0xff] %vm358, %v2459
      %2476 = vst.msk [vmem:[%s145 + $0x68] sm:$0xff] %vm358, %v2460
      %2477 = vst.msk [vmem:[%s145 + $0x70] sm:$0xff] %vm358, %v2461
      %2478 = vst.msk [vmem:[%s145 + $0x78] sm:$0xff] %vm358, %v2462
      %s2479 = smul.u32 16, %s13
      %p2480 = scmp.lt.s32.totalorder %s2479, 31
      %s2481 = scalar_select %p2480, %s2479, 31
      %s2482 = smul.addr %s2481, 8
      %s2483 = scalar_lea.vmem %s2, %s2482
      // Predicated region
      $region29: #{_gcn_forward_batched.1} parent=27 // pred_check
        %p2484 = pneg %p78
      $region30: #{_gcn_forward_batched.1} parent=27 // pred_check_branch
        %2486 = sbr.rel (%p2484) target = $region32
      $region31: #{_gcn_forward_batched.1} parent=27 // pred_region
        %s2487 = smul.u32 16, %s13
      $region32: #{_gcn_forward_batched.1} parent=27 // pred_fallthru
        _
    $region28: #{_gcn_forward_batched.1} parent=5 // pred_fallthru
      _
    %p2488 = scmp.le.s32.totalorder 2, %s8
    // Predicated region
    $region33: #{_gcn_forward_batched.1} parent=5 // pred_check
      %p2489 = pneg %p2488
    $region34: #{_gcn_forward_batched.1} parent=5 // pred_check_branch
      %2491 = sbr.rel (%p2489) target = $region36
    $region35: #{_gcn_forward_batched.1} parent=5 // pred_region
      %s2492 = ssub.s32 %s8, 2
      // Predicated region
      $region37: #{_gcn_forward_batched.1} parent=35 // pred_check
        %p2493 = pneg %p84
      $region38: #{_gcn_forward_batched.1} parent=35 // pred_check_branch
        %2495 = sbr.rel (%p2493) target = $region40
      $region39: #{_gcn_forward_batched.1} parent=35 // pred_region
        %s2496 = smul.u32 16, %s14
        %p2497 = scmp.lt.s32.totalorder %s2496, 31
        %s2498 = scalar_select %p2497, %s2496, 31
        %s2499 = smul.addr %s2498, 8
        %s2500 = scalar_lea.vmem %s2, %s2499
      $region40: #{_gcn_forward_batched.1} parent=35 // pred_fallthru
        _
    $region36: #{_gcn_forward_batched.1} parent=5 // pred_fallthru
      _
  $region6: #{_gcn_forward_batched.1} parent=0 // loop_footer
    %s12 = sadd.s32 1, %s8
  $region7: #{_gcn_forward_batched.1} parent=0 // loop_footer_branch
    %7 = sbr.rel target = $region3
  $region8: #{_gcn_forward_batched.1} parent=0 // loop_exit
    _

</llo_original>
